<compile_context>
chip_gen: v5e
topology: v5e:2x2
jax: 0.10.0
libtpu: 0.0.40
codegen_flags: <defaults>
</compile_context>

<pallas_src>
import functools
import math

import jax
import jax.numpy as jnp
from jax.experimental import pallas as pl
from jax.experimental.pallas import tpu as pltpu

_INV_SQRT2 = 1.0 / math.sqrt(2.0)

# ------------------------------ precision flag ------------------------------ #
_USE_BF16_MATMUL = True                                   # gate for f32 parity
_MM_DTYPE = jnp.bfloat16 if _USE_BF16_MATMUL else jnp.float32
_ACT_DTYPE = _MM_DTYPE          # matmul-only intermediates (qkv, attention out)

# --------------------------- tiling configuration --------------------------- #

def _query_vmem_bytes():
    try:
        return int(pltpu.get_tpu_info().vmem_capacity_bytes)
    except Exception:
        return 64 * 1024 * 1024                 # conservative (v7x-sized) fallback


_VMEM_BYTES = _query_vmem_bytes()
_VMEM_LIMIT = int(min(_VMEM_BYTES // 2, 64 * 1024 * 1024))

# Generic GEMM tile targets — same on every generation (per-kernel footprints are
# small); VMEM-heavy kernels (ffn_ln, attention) bound their own footprint below.
_TM, _TN, _TK = 512, 256, 512
_ATTN_TQ = 256                                  # attention query-tile target


def _cparams(dimension_semantics):
    return pltpu.CompilerParams(dimension_semantics=dimension_semantics,
                                vmem_limit_bytes=_VMEM_LIMIT)


def _round_up(x, m):
    return (x + m - 1) // m * m


def _pick_tile(dim, target, quantum=128):
    """Return (tile, padded_dim), tile | padded_dim, tile <= target, minimizing
    padding waste (pads only up to the tile quantum, not the full tile target)."""
    if dim <= target:
        return dim, dim                          # full-dim block is always legal
    best_t, best_pad = None, None
    t = (target // quantum) * quantum
    while t >= quantum:
        padded = _round_up(dim, t)
        if best_pad is None or padded < best_pad:
            best_t, best_pad = t, padded
        t -= quantum
    return best_t, best_pad


def _pad2(a, rows, cols):
    r, c = a.shape
    if r == rows and c == cols:
        return a
    return jnp.pad(a, ((0, rows - r), (0, cols - c)))


# ------------------------------- elementwise -------------------------------- #

def _gelu_exact(x):
    # F.gelu default: 0.5*x*(1+erf(x/sqrt(2)))
    return 0.5 * x * (1.0 + jax.lax.erf(x * _INV_SQRT2))


def _mish(x):
    # x * tanh(softplus(x)); softplus with PyTorch threshold=20
    xm = jnp.minimum(x, 20.0)
    sp = jnp.where(x > 20.0, x, jnp.log(1.0 + jnp.exp(xm)))
    return x * jnp.tanh(sp)


def _layernorm(y, gamma, beta, eps):
    mu = jnp.mean(y, axis=-1, keepdims=True)
    var = jnp.mean((y - mu) ** 2, axis=-1, keepdims=True)
    return (y - mu) * jax.lax.rsqrt(var + eps) * gamma + beta


# --------------------- kernel 1: tiled linear (+pre/post act) ---------------- #

def _linear_kernel(x_ref, w_ref, b_ref, o_ref, acc_ref, *, act, pre_act):
    k = pl.program_id(2)

    @pl.when(k == 0)
    def _():
        acc_ref[...] = jnp.zeros_like(acc_ref)

    x = x_ref[...]
    if pre_act == "mish":
        x = _mish(x.astype(jnp.float32))       # mish(0)=0, so K zero-padding stays exact
    acc_ref[...] += jnp.dot(x.astype(w_ref.dtype), w_ref[...],
                            preferred_element_type=jnp.float32)

    @pl.when(k == pl.num_programs(2) - 1)
    def _():
        y = acc_ref[...] + b_ref[...]
        if act == "gelu":
            y = _gelu_exact(y)
        o_ref[...] = y.astype(o_ref.dtype)


def linear_act(x, w, b, act=None, pre_act=None, n_pad_to=None, out_dtype=jnp.float32):
    """y = [act]( [pre_act](x) @ w + b ).  x:(M,K) w:(K,N) b:(N,).
    n_pad_to pads the output feature dim (lane-dense stores); sliced back by caller."""
    M, K = x.shape
    N = w.shape[1]
    tm, Mp = _pick_tile(M, _TM, 128)
    tk, Kp = _pick_tile(K, _TK, 128)
    n_target = _round_up(N, n_pad_to) if n_pad_to else N
    tn, Np = _pick_tile(n_target, _TN, 128)

    xp = _pad2(x, Mp, Kp)
    wp = _pad2(w, Kp, Np)
    bp = jnp.pad(b, (0, Np - N)) if Np != N else b

    out = pl.pallas_call(
        functools.partial(_linear_kernel, act=act, pre_act=pre_act),
        grid=(Mp // tm, Np // tn, Kp // tk),
        in_specs=[
            pl.BlockSpec((tm, tk), lambda i, j, k: (i, k)),
            pl.BlockSpec((tk, tn), lambda i, j, k: (k, j)),
            pl.BlockSpec((1, tn), lambda i, j, k: (0, j)),
        ],
        out_specs=pl.BlockSpec((tm, tn), lambda i, j, k: (i, j)),
        out_shape=jax.ShapeDtypeStruct((Mp, Np), out_dtype),
        scratch_shapes=[pltpu.VMEM((tm, tn), jnp.float32)],
        compiler_params=_cparams(("parallel", "parallel", "arbitrary")),
    )(xp, wp, bp.reshape(1, Np))

    if Mp != M or Np != N:
        out = out[:M, :N]
    return out


# ------------------ kernel 2: linear (+act) + LayerNorm (fused) -------------- #

def _linear_ln_kernel(x_ref, w_ref, b_ref, g_ref, be_ref, o_ref, acc_ref, *, act, eps):
    k = pl.program_id(1)

    @pl.when(k == 0)
    def _():
        acc_ref[...] = jnp.zeros_like(acc_ref)

    acc_ref[...] += jnp.dot(x_ref[...].astype(w_ref.dtype), w_ref[...],
                            preferred_element_type=jnp.float32)

    @pl.when(k == pl.num_programs(1) - 1)
    def _():
        y = acc_ref[...] + b_ref[...]
        if act == "gelu":
            y = _gelu_exact(y)
        o_ref[...] = _layernorm(y, g_ref[...], be_ref[...], eps).astype(o_ref.dtype)


def linear_ln(x, w, b, gamma, beta, act=None, eps=1e-5):
    """LayerNorm( [act](x @ w + b) ).  LN feature dim N kept as one full block."""
    M, K = x.shape
    N = w.shape[1]
    tm, Mp = _pick_tile(M, _TM, 128)
    tk, Kp = _pick_tile(K, _TK, 128)

    xp = _pad2(x, Mp, Kp)
    wp = _pad2(w, Kp, N)

    out = pl.pallas_call(
        functools.partial(_linear_ln_kernel, act=act, eps=eps),
        grid=(Mp // tm, Kp // tk),
        in_specs=[
            pl.BlockSpec((tm, tk), lambda i, k: (i, k)),
            pl.BlockSpec((tk, N), lambda i, k: (k, 0)),
            pl.BlockSpec((1, N), lambda i, k: (0, 0)),
            pl.BlockSpec((1, N), lambda i, k: (0, 0)),
            pl.BlockSpec((1, N), lambda i, k: (0, 0)),
        ],
        out_specs=pl.BlockSpec((tm, N), lambda i, k: (i, 0)),
        out_shape=jax.ShapeDtypeStruct((Mp, N), jnp.float32),
        scratch_shapes=[pltpu.VMEM((tm, N), jnp.float32)],
        compiler_params=_cparams(("parallel", "arbitrary")),
    )(xp, wp, b.reshape(1, N), gamma.reshape(1, N), beta.reshape(1, N))
    return out[:M] if Mp != M else out


# ------ kernel 3: FFN with d_ff reduction axis  LN2(x + W2 gelu(W1 x)) -------- #

def _ffn_ln_kernel(x_ref, w1_ref, b1_ref, w2_ref, b2_ref, g_ref, be_ref, o_ref,
                   acc_ref, *, eps):
    f = pl.program_id(1)

    @pl.when(f == 0)
    def _():
        acc_ref[...] = jnp.zeros_like(acc_ref)

    x = x_ref[...]
    h = _gelu_exact(jnp.dot(x.astype(w1_ref.dtype), w1_ref[...],
                            preferred_element_type=jnp.float32) + b1_ref[...])
    acc_ref[...] += jnp.dot(h.astype(w2_ref.dtype), w2_ref[...],
                            preferred_element_type=jnp.float32)

    @pl.when(f == pl.num_programs(1) - 1)
    def _():
        y = acc_ref[...] + b2_ref[...] + x
        o_ref[...] = _layernorm(y, g_ref[...], be_ref[...], eps).astype(o_ref.dtype)


def ffn_ln(x, w1, b1, w2, b2, gamma, beta, eps=1e-5):
    """Encoder FFN block; d_ff is a reduction grid axis so only (D,tf)/(tf,D) weight
    slices (plus a (tm,D) f32 accumulator) live in VMEM — bounded on v7x."""
    M, D = x.shape
    F = w1.shape[1]
    tm, Mp = _pick_tile(M, _TM, 128)
    tf, Fp = _pick_tile(F, _TK, 128)

    xp = _pad2(x, Mp, D)
    w1p = _pad2(w1, D, Fp).astype(_MM_DTYPE)
    w2p = _pad2(w2, Fp, D).astype(_MM_DTYPE)
    b1p = jnp.pad(b1, (0, Fp - F)) if Fp != F else b1

    out = pl.pallas_call(
        functools.partial(_ffn_ln_kernel, eps=eps),
        grid=(Mp // tm, Fp // tf),
        in_specs=[
            pl.BlockSpec((tm, D), lambda i, f: (i, 0)),
            pl.BlockSpec((D, tf), lambda i, f: (0, f)),
            pl.BlockSpec((1, tf), lambda i, f: (0, f)),
            pl.BlockSpec((tf, D), lambda i, f: (f, 0)),
            pl.BlockSpec((1, D), lambda i, f: (0, 0)),
            pl.BlockSpec((1, D), lambda i, f: (0, 0)),
            pl.BlockSpec((1, D), lambda i, f: (0, 0)),
        ],
        out_specs=pl.BlockSpec((tm, D), lambda i, f: (i, 0)),
        out_shape=jax.ShapeDtypeStruct((Mp, D), jnp.float32),
        scratch_shapes=[pltpu.VMEM((tm, D), jnp.float32)],
        compiler_params=_cparams(("parallel", "arbitrary")),
    )(xp, w1p, b1p.reshape(1, Fp), w2p, b2.reshape(1, D),
      gamma.reshape(1, D), beta.reshape(1, D))
    return out[:M] if Mp != M else out


# ---------------- kernel 4: attention (per batch / head / q-tile) ------------ #

def _attn_kernel(q_ref, k_ref, v_ref, bias_ref, o_ref, *, scale):
    q = q_ref[0, 0, 0]                       # (tq, Dh)
    k = k_ref[0, 0, 0]                       # (S,  Dh)
    v = v_ref[0, 0, 0]                       # (S,  Dh)
    s = jax.lax.dot_general(q, k, (((1,), (1,)), ((), ())),
                            preferred_element_type=jnp.float32) * scale
    s = s + bias_ref[0]                      # (1, S) key-padding bias, broadcast over rows
    s = s - jnp.max(s, axis=-1, keepdims=True)
    p = jnp.exp(s)
    p = p * pl.reciprocal(jnp.sum(p, axis=-1, keepdims=True), approx=True)
    o_ref[0, 0] = jnp.dot(p.astype(v.dtype), v,
                          preferred_element_type=jnp.float32).astype(o_ref.dtype)


def attention(qkvh, bias, *, n_head, tq):
    """qkvh: (3, B, H, S, Dh) head-major (no in-kernel head slicing/concat).
    bias: (B, 1, S).  Returns (B, H, S, Dh) in _ACT_DTYPE."""
    _, B, H, S, Dh = qkvh.shape
    assert H == n_head and S % tq == 0
    return pl.pallas_call(
        functools.partial(_attn_kernel, scale=1.0 / math.sqrt(Dh)),
        grid=(B, H, S // tq),
        in_specs=[
            pl.BlockSpec((1, 1, 1, tq, Dh), lambda b, h, i: (0, b, h, i, 0)),
            pl.BlockSpec((1, 1, 1, S, Dh), lambda b, h, i: (1, b, h, 0, 0)),
            pl.BlockSpec((1, 1, 1, S, Dh), lambda b, h, i: (2, b, h, 0, 0)),
            pl.BlockSpec((1, 1, S), lambda b, h, i: (b, 0, 0)),
        ],
        out_specs=pl.BlockSpec((1, 1, tq, Dh), lambda b, h, i: (b, h, i, 0)),
        out_shape=jax.ShapeDtypeStruct((B, H, S, Dh), _ACT_DTYPE),
        compiler_params=_cparams(("parallel", "parallel", "parallel")),
    )(qkvh, qkvh, qkvh, bias)


# ---- kernel 5: head-merge + out_proj + residual + LayerNorm1 (fused) --------- #

def _attn_out_ln_kernel(a_ref, w_ref, b_ref, res_ref, g_ref, be_ref, o_ref,
                        *, n_head, eps):
    # a_ref: (1, H, tt, Dh)  w_ref: (H, Dh, E)  res_ref/o_ref: (1, tt, E)
    acc = jnp.dot(a_ref[0, 0], w_ref[0], preferred_element_type=jnp.float32)
    for h in range(1, n_head):               # heads indexed on a non-lane axis
        acc += jnp.dot(a_ref[0, h], w_ref[h], preferred_element_type=jnp.float32)
    y = acc + b_ref[...] + res_ref[0]
    o_ref[0] = _layernorm(y, g_ref[...], be_ref[...], eps).astype(o_ref.dtype)


def attn_out_ln(a, w3, b, gamma, beta, residual_bse, *, tt, eps=1e-5):
    """LayerNorm1( residual + out_proj(attn) ) directly from head-major attn output;
    no HBM head-merge transpose, lane-dense (tt, E) output stores."""
    B, H, S, Dh = a.shape
    E = w3.shape[2]
    assert S % tt == 0
    out = pl.pallas_call(
        functools.partial(_attn_out_ln_kernel, n_head=H, eps=eps),
        grid=(B, S // tt),
        in_specs=[
            pl.BlockSpec((1, H, tt, Dh), lambda b, i: (b, 0, i, 0)),
            pl.BlockSpec((H, Dh, E), lambda b, i: (0, 0, 0)),
            pl.BlockSpec((1, E), lambda b, i: (0, 0)),
            pl.BlockSpec((1, tt, E), lambda b, i: (b, i, 0)),
            pl.BlockSpec((1, E), lambda b, i: (0, 0)),
            pl.BlockSpec((1, E), lambda b, i: (0, 0)),
        ],
        out_specs=pl.BlockSpec((1, tt, E), lambda b, i: (b, i, 0)),
        out_shape=jax.ShapeDtypeStruct((B, S, E), jnp.float32),
        compiler_params=_cparams(("parallel", "parallel")),
    )(a, w3, b.reshape(1, E), residual_bse, gamma.reshape(1, E), beta.reshape(1, E))
    return out.reshape(B * S, E)


# ------------------------------- model glue -------------------------------- #

def encoder_layer(x2, bias, B, Sp, attn_p, lp, n_head, tq):
    """x2: (B*Sp, E) batch-major token rows (f32 residual stream)."""
    E = x2.shape[1]
    Dh = E // n_head
    # in_proj GEMM, qkv stored in bf16 (halves the HBM round trip)
    qkv = linear_act(x2, attn_p["in_w"], attn_p["in_b"], out_dtype=_ACT_DTYPE)
    # head-major layout once per layer (pre-split in the wrapper; bf16 transpose)
    qkvh = qkv.reshape(B, Sp, 3, n_head, Dh).transpose(2, 0, 3, 1, 4)  # (3,B,H,Sp,Dh)
    a = attention(qkvh, bias, n_head=n_head, tq=tq)                    # (B,H,Sp,Dh)
    x2 = attn_out_ln(a, attn_p["out_w3"], attn_p["out_b"],
                     lp["ln1_g"], lp["ln1_b"], x2.reshape(B, Sp, E), tt=tq)
    x2 = ffn_ln(x2, lp["w1"], lp["b1"], lp["w2"], lp["b2"],
                lp["ln2_g"], lp["ln2_b"])
    return x2


def transformer_model(sequence, king_id, params, *, n_head, pad_idx=0):
    del king_id                                  # baseline embedding path ignores king_id
    B, S = sequence.shape
    E = params["embed"].shape[1]
    assert E % n_head == 0
    Dh = E // n_head

    # token padding chosen once (multiple of the query tile) and carried end-to-end
    tq, Sp = _pick_tile(S, _ATTN_TQ, 8)

    x = params["embed"][sequence].astype(jnp.float32)           # (B, S, E)
    if Sp != S:
        x = jnp.pad(x, ((0, 0), (0, Sp - S), (0, 0)))
    x2 = x.reshape(B * Sp, E)

    # key-padding bias, (B, 1, Sp): large finite negative at pad tokens / padded slots
    key_is_pad = sequence == pad_idx
    if Sp != S:
        key_is_pad = jnp.pad(key_is_pad, ((0, 0), (0, Sp - S)), constant_values=True)
    bias = jnp.where(key_is_pad, -1e30, 0.0).astype(jnp.float32)[:, None, :]

    # shared MultiheadAttention weights, cast/reshaped once per forward
    attn_p = {
        "in_w": params["attn"]["in_w"].astype(_MM_DTYPE),
        "in_b": params["attn"]["in_b"],
        "out_w3": params["attn"]["out_w"].reshape(n_head, Dh, E).astype(_MM_DTYPE),
        "out_b": params["attn"]["out_b"],
    }

    layers = []
    for lp in params["layers"]:
        layers.append({
            "w1": lp["w1"].astype(_MM_DTYPE), "b1": lp["b1"],
            "w2": lp["w2"].astype(_MM_DTYPE), "b2": lp["b2"],
            "ln1_g": lp["ln1_g"], "ln1_b": lp["ln1_b"],
            "ln2_g": lp["ln2_g"], "ln2_b": lp["ln2_b"],
        })

    for lp in layers:
        x2 = encoder_layer(x2, bias, B, Sp, attn_p, lp, n_head, tq)

    # output head: LN(gelu(linear1(x)))  then  linear2(mish(.)) with lane-padded N
    h = linear_ln(x2, params["out1_w"].astype(_MM_DTYPE), params["out1_b"],
                  params["out_ln_g"], params["out_ln_b"], act="gelu")
    out = linear_act(h, params["out2_w"].astype(_MM_DTYPE), params["out2_b"],
                     pre_act="mish", n_pad_to=128)
    out = out.reshape(B, Sp, -1)
    return out[:, :S, :]


# ---------------------------- parameter creation ---------------------------- #

def init_params(key, vocab, d_model, d_emb, n_head, d_ff, n_layers, n_classes=10):
    keys = iter(jax.random.split(key, 16 + 8 * n_layers))

    def u(shape, scale=0.1):
        return jax.random.uniform(next(keys), shape, jnp.float32, -scale, scale)

    params = {
        "embed": jax.random.normal(next(keys), (vocab, d_model), jnp.float32),
        # single MultiheadAttention shared by every encoder layer
        "attn": {
            "in_w": u((d_model, 3 * d_model)),   # stored transposed: (in, out)
            "in_b": jnp.zeros((3 * d_model,), jnp.float32),
            "out_w": u((d_model, d_model)),
            "out_b": jnp.zeros((d_model,), jnp.float32),
        },
        "layers": [],
        # output head (init_weights: uniform(-0.1, 0.1), zero bias)
        "out1_w": u((d_model, d_emb)),
        "out1_b": jnp.zeros((d_emb,), jnp.float32),
        "out_ln_g": jnp.ones((d_emb,), jnp.float32),
        "out_ln_b": jnp.zeros((d_emb,), jnp.float32),
        "out2_w": u((d_emb, n_classes)),
        "out2_b": jnp.zeros((n_classes,), jnp.float32),
    }
    for _ in range(n_layers):
        params["layers"].append({
            "w1": u((d_model, d_ff)),
            "b1": jnp.zeros((d_ff,), jnp.float32),
            "w2": u((d_ff, d_model)),
            "b2": jnp.zeros((d_model,), jnp.float32),
            "ln1_g": jnp.ones((d_model,), jnp.float32),
            "ln1_b": jnp.zeros((d_model,), jnp.float32),
            "ln2_g": jnp.ones((d_model,), jnp.float32),
            "ln2_b": jnp.zeros((d_model,), jnp.float32),
        })
    return params


# ----------------------------------- main ----------------------------------- #

if __name__ == "__main__":
    vocab, d_model, d_emb = 50, 32, 16
    n_head, d_ff, n_layers = 4, 64, 2
    B, S = 2, 8

    key = jax.random.PRNGKey(0)
    pkey, skey = jax.random.split(key)

    params = init_params(pkey, vocab, d_model, d_emb, n_head, d_ff, n_layers)

    sequence = jax.random.randint(skey, (B, S), 3, vocab, dtype=jnp.int32)
    sequence = sequence.at[0, -2:].set(0)          # some pad tokens (pad_idx=0)
    king_id = jnp.zeros((B,), jnp.int32)           # unused in baseline path

    fwd = jax.jit(functools.partial(transformer_model, n_head=n_head, pad_idx=0))
    out = fwd(sequence, king_id, params)
    out = jax.block_until_ready(out)

    assert out.shape == (B, S, 10), out.shape
    assert bool(jnp.all(jnp.isfinite(out)))
    print("KERNEL_OK")
</pallas_src>

<mosaic_0001>
module attributes {stable_mosaic.version = 11 : i64} {
  func.func @_linear_kernel(%arg0: i32, %arg1: i32, %arg2: i32, %arg3: memref<16x32xf32, #tpu.memory_space<vmem>>, %arg4: memref<32x96xbf16, #tpu.memory_space<vmem>>, %arg5: memref<1x96xf32, #tpu.memory_space<vmem>>, %arg6: memref<16x96xbf16, #tpu.memory_space<vmem>>, %arg7: memref<16x96xf32, #tpu.memory_space<vmem>>) attributes {dimension_semantics = [#tpu.dimension_semantics<parallel>, #tpu.dimension_semantics<parallel>, #tpu.dimension_semantics<arbitrary>], iteration_bounds = array<i64: 1, 1, 1>, scalar_prefetch = 0 : i64, scratch_operands = 1 : i64, tpu.core_type = #tpu.core_type<tc>, window_params = [{transform_indices = @transform_0, window_bounds = array<i64: 16, 32>}, {transform_indices = @transform_1, window_bounds = array<i64: 32, 96>}, {transform_indices = @transform_2, window_bounds = array<i64: 1, 96>}, {transform_indices = @transform_3, window_bounds = array<i64: 16, 96>}]} {
    %c0_i32 = arith.constant 0 : i32
    %0 = arith.cmpi eq, %arg2, %c0_i32 : i32
    %1 = arith.extui %0 : i1 to i32
    %c0_i32_0 = arith.constant 0 : i32
    %2 = arith.cmpi ne, %1, %c0_i32_0 : i32
    scf.if %2 {
      %cst_10 = arith.constant 0.000000e+00 : f32
      %13 = vector.broadcast %cst_10 : f32 to vector<16x96xf32>
      %c0_11 = arith.constant 0 : index
      %c0_12 = arith.constant 0 : index
      %14 = vector.load %arg7[%c0_11, %c0_12] : memref<16x96xf32, #tpu.memory_space<vmem>>, vector<16x96xf32>
      tpu.vector_store %arg7[%c0_11, %c0_12], %13 {strides = array<i32>} : memref<16x96xf32, #tpu.memory_space<vmem>>, vector<16x96xf32>,
    } else {
    }
    %c0 = arith.constant 0 : index
    %c0_1 = arith.constant 0 : index
    %3 = vector.load %arg3[%c0, %c0_1] : memref<16x32xf32, #tpu.memory_space<vmem>>, vector<16x32xf32>
    %c0_2 = arith.constant 0 : index
    %c0_3 = arith.constant 0 : index
    %4 = vector.load %arg7[%c0_2, %c0_3] : memref<16x96xf32, #tpu.memory_space<vmem>>, vector<16x96xf32>
    %5 = arith.truncf %3 : vector<16x32xf32> to vector<16x32xbf16>
    %c0_4 = arith.constant 0 : index
    %c0_5 = arith.constant 0 : index
    %6 = vector.load %arg4[%c0_4, %c0_5] : memref<32x96xbf16, #tpu.memory_space<vmem>>, vector<32x96xbf16>
    %cst = arith.constant dense<0.000000e+00> : vector<16x96xf32>
    %7 = tpu.matmul %5, %6, %cst {dimension_numbers = #tpu.dot_dimension_numbers<[1], [0], [0], [1], [0, 0, 1, 1], [], []>} : vector<16x32xbf16>, vector<32x96xbf16>, vector<16x96xf32> -> vector<16x96xf32>
    %8 = arith.addf %4, %7 : vector<16x96xf32>
    %c0_6 = arith.constant 0 : index
    %c0_7 = arith.constant 0 : index
    %9 = vector.load %arg7[%c0_6, %c0_7] : memref<16x96xf32, #tpu.memory_space<vmem>>, vector<16x96xf32>
    tpu.vector_store %arg7[%c0_6, %c0_7], %8 {strides = array<i32>} : memref<16x96xf32, #tpu.memory_space<vmem>>, vector<16x96xf32>,
    %c0_i32_8 = arith.constant 0 : i32
    %10 = arith.cmpi eq, %arg2, %c0_i32_8 : i32
    %11 = arith.extui %10 : i1 to i32
    %c0_i32_9 = arith.constant 0 : i32
    %12 = arith.cmpi ne, %11, %c0_i32_9 : i32
    scf.if %12 {
      %c0_10 = arith.constant 0 : index
      %c0_11 = arith.constant 0 : index
      %13 = vector.load %arg7[%c0_10, %c0_11] : memref<16x96xf32, #tpu.memory_space<vmem>>, vector<16x96xf32>
      %c0_12 = arith.constant 0 : index
      %c0_13 = arith.constant 0 : index
      %14 = vector.load %arg5[%c0_12, %c0_13] : memref<1x96xf32, #tpu.memory_space<vmem>>, vector<1x96xf32>
      %15 = vector.broadcast %14 : vector<1x96xf32> to vector<16x96xf32>
      %16 = arith.addf %13, %15 : vector<16x96xf32>
      %17 = arith.truncf %16 : vector<16x96xf32> to vector<16x96xbf16>
      %c0_14 = arith.constant 0 : index
      %c0_15 = arith.constant 0 : index
      %18 = vector.load %arg6[%c0_14, %c0_15] : memref<16x96xbf16, #tpu.memory_space<vmem>>, vector<16x96xbf16>
      tpu.vector_store %arg6[%c0_14, %c0_15], %17 {strides = array<i32>} : memref<16x96xbf16, #tpu.memory_space<vmem>>, vector<16x96xbf16>,
    } else {
    }
    return
  }
  func.func @transform_0(%arg0: i32, %arg1: i32, %arg2: i32) -> (i32, i32) {
    %c0_i32 = arith.constant 0 : i32
    return %arg0, %arg2 : i32, i32
  }
  func.func @transform_1(%arg0: i32, %arg1: i32, %arg2: i32) -> (i32, i32) {
    %c0_i32 = arith.constant 0 : i32
    return %arg2, %arg1 : i32, i32
  }
  func.func @transform_2(%arg0: i32, %arg1: i32, %arg2: i32) -> (i32, i32) {
    %c0_i32 = arith.constant 0 : i32
    %c0_i32_0 = arith.constant 0 : i32
    return %c0_i32, %arg1 : i32, i32
  }
  func.func @transform_3(%arg0: i32, %arg1: i32, %arg2: i32) -> (i32, i32) {
    %c0_i32 = arith.constant 0 : i32
    return %arg0, %arg1 : i32, i32
  }
}

module attributes {stable_mosaic.version = 11 : i64} {
  func.func @_attn_kernel(%arg0: i32, %arg1: i32, %arg2: i32, %arg3: memref<1x1x1x8x8xbf16, #tpu.memory_space<vmem>>, %arg4: memref<1x1x1x8x8xbf16, #tpu.memory_space<vmem>>, %arg5: memref<1x1x1x8x8xbf16, #tpu.memory_space<vmem>>, %arg6: memref<1x1x8xf32, #tpu.memory_space<vmem>>, %arg7: memref<1x1x8x8xbf16, #tpu.memory_space<vmem>>) attributes {dimension_semantics = [#tpu.dimension_semantics<parallel>, #tpu.dimension_semantics<parallel>, #tpu.dimension_semantics<parallel>], iteration_bounds = array<i64: 2, 4, 1>, scalar_prefetch = 0 : i64, scratch_operands = 0 : i64, tpu.core_type = #tpu.core_type<tc>, window_params = [{transform_indices = @transform_0, window_bounds = array<i64: 1, 1, 1, 8, 8>}, {transform_indices = @transform_1, window_bounds = array<i64: 1, 1, 1, 8, 8>}, {transform_indices = @transform_2, window_bounds = array<i64: 1, 1, 1, 8, 8>}, {transform_indices = @transform_3, window_bounds = array<i64: 1, 1, 8>}, {transform_indices = @transform_4, window_bounds = array<i64: 1, 1, 8, 8>}]} {
    %c0 = arith.constant 0 : index
    %c0_0 = arith.constant 0 : index
    %c0_1 = arith.constant 0 : index
    %c0_2 = arith.constant 0 : index
    %c0_3 = arith.constant 0 : index
    %0 = vector.load %arg3[%c0, %c0_0, %c0_1, %c0_2, %c0_3] : memref<1x1x1x8x8xbf16, #tpu.memory_space<vmem>>, vector<1x1x1x8x8xbf16>
    %1 = vector.shape_cast %0 : vector<1x1x1x8x8xbf16> to vector<8x8xbf16>
    %c0_4 = arith.constant 0 : index
    %c0_5 = arith.constant 0 : index
    %c0_6 = arith.constant 0 : index
    %c0_7 = arith.constant 0 : index
    %c0_8 = arith.constant 0 : index
    %2 = vector.load %arg4[%c0_4, %c0_5, %c0_6, %c0_7, %c0_8] : memref<1x1x1x8x8xbf16, #tpu.memory_space<vmem>>, vector<1x1x1x8x8xbf16>
    %3 = vector.shape_cast %2 : vector<1x1x1x8x8xbf16> to vector<8x8xbf16>
    %c0_9 = arith.constant 0 : index
    %c0_10 = arith.constant 0 : index
    %c0_11 = arith.constant 0 : index
    %c0_12 = arith.constant 0 : index
    %c0_13 = arith.constant 0 : index
    %4 = vector.load %arg5[%c0_9, %c0_10, %c0_11, %c0_12, %c0_13] : memref<1x1x1x8x8xbf16, #tpu.memory_space<vmem>>, vector<1x1x1x8x8xbf16>
    %5 = vector.shape_cast %4 : vector<1x1x1x8x8xbf16> to vector<8x8xbf16>
    %cst = arith.constant dense<0.000000e+00> : vector<8x8xf32>
    %6 = tpu.matmul %1, %3, %cst {dimension_numbers = #tpu.dot_dimension_numbers<[1], [1], [0], [0], [0, 0, 1, 0], [], []>} : vector<8x8xbf16>, vector<8x8xbf16>, vector<8x8xf32> -> vector<8x8xf32>
    %cst_14 = arith.constant 0.353553385 : f32
    %7 = vector.broadcast %cst_14 : f32 to vector<8x8xf32>
    %8 = arith.mulf %6, %7 : vector<8x8xf32>
    %c0_15 = arith.constant 0 : index
    %c0_16 = arith.constant 0 : index
    %c0_17 = arith.constant 0 : index
    %9 = vector.load %arg6[%c0_15, %c0_16, %c0_17] : memref<1x1x8xf32, #tpu.memory_space<vmem>>, vector<1x1x8xf32>
    %10 = vector.shape_cast %9 : vector<1x1x8xf32> to vector<1x8xf32>
    %11 = vector.broadcast %10 : vector<1x8xf32> to vector<8x8xf32>
    %12 = arith.addf %8, %11 : vector<8x8xf32>
    %cst_18 = arith.constant dense<0xFF800000> : vector<8xf32>
    %13 = vector.multi_reduction <maximumf>, %12, %cst_18 [1] : vector<8x8xf32> to vector<8xf32>
    %14 = vector.shape_cast %13 : vector<8xf32> to vector<8x1xf32>
    %15 = vector.broadcast %14 : vector<8x1xf32> to vector<8x8xf32>
    %16 = arith.subf %12, %15 : vector<8x8xf32>
    %17 = math.exp %16 : vector<8x8xf32>
    %cst_19 = arith.constant dense<0.000000e+00> : vector<8xf32>
    %18 = vector.multi_reduction <add>, %17, %cst_19 [1] : vector<8x8xf32> to vector<8xf32>
    %19 = vector.shape_cast %18 : vector<8xf32> to vector<8x1xf32>
    %20 = tpu.reciprocal %19 {approx = true} : vector<8x1xf32> -> vector<8x1xf32>
    %21 = vector.broadcast %20 : vector<8x1xf32> to vector<8x8xf32>
    %22 = arith.mulf %17, %21 : vector<8x8xf32>
    %23 = arith.truncf %22 : vector<8x8xf32> to vector<8x8xbf16>
    %cst_20 = arith.constant dense<0.000000e+00> : vector<8x8xf32>
    %24 = tpu.matmul %23, %5, %cst_20 {dimension_numbers = #tpu.dot_dimension_numbers<[1], [0], [0], [1], [0, 0, 1, 1], [], []>} : vector<8x8xbf16>, vector<8x8xbf16>, vector<8x8xf32> -> vector<8x8xf32>
    %25 = arith.truncf %24 : vector<8x8xf32> to vector<8x8xbf16>
    %c0_21 = arith.constant 0 : index
    %c0_22 = arith.constant 0 : index
    %c0_23 = arith.constant 0 : index
    %c0_24 = arith.constant 0 : index
    %26 = vector.load %arg7[%c0_21, %c0_22, %c0_23, %c0_24] : memref<1x1x8x8xbf16, #tpu.memory_space<vmem>>, vector<1x1x8x8xbf16>
    %27 = vector.shape_cast %26 : vector<1x1x8x8xbf16> to vector<8x8xbf16>
    %28 = vector.shape_cast %25 : vector<8x8xbf16> to vector<1x1x8x8xbf16>
    tpu.vector_store %arg7[%c0_21, %c0_22, %c0_23, %c0_24], %28 {strides = array<i32>} : memref<1x1x8x8xbf16, #tpu.memory_space<vmem>>, vector<1x1x8x8xbf16>,
    return
  }
  func.func @transform_0(%arg0: i32, %arg1: i32, %arg2: i32) -> (i32, i32, i32, i32, i32) {
    %c0_i32 = arith.constant 0 : i32
    %c0_i32_0 = arith.constant 0 : i32
    %c0_i32_1 = arith.constant 0 : i32
    return %c0_i32, %arg0, %arg1, %arg2, %c0_i32_0 : i32, i32, i32, i32, i32
  }
  func.func @transform_1(%arg0: i32, %arg1: i32, %arg2: i32) -> (i32, i32, i32, i32, i32) {
    %c1_i32 = arith.constant 1 : i32
    %c0_i32 = arith.constant 0 : i32
    %c0_i32_0 = arith.constant 0 : i32
    %c0_i32_1 = arith.constant 0 : i32
    return %c1_i32, %arg0, %arg1, %c0_i32, %c0_i32_0 : i32, i32, i32, i32, i32
  }
  func.func @transform_2(%arg0: i32, %arg1: i32, %arg2: i32) -> (i32, i32, i32, i32, i32) {
    %c2_i32 = arith.constant 2 : i32
    %c0_i32 = arith.constant 0 : i32
    %c0_i32_0 = arith.constant 0 : i32
    %c0_i32_1 = arith.constant 0 : i32
    return %c2_i32, %arg0, %arg1, %c0_i32, %c0_i32_0 : i32, i32, i32, i32, i32
  }
  func.func @transform_3(%arg0: i32, %arg1: i32, %arg2: i32) -> (i32, i32, i32) {
    %c0_i32 = arith.constant 0 : i32
    %c0_i32_0 = arith.constant 0 : i32
    %c0_i32_1 = arith.constant 0 : i32
    return %arg0, %c0_i32, %c0_i32_0 : i32, i32, i32
  }
  func.func @transform_4(%arg0: i32, %arg1: i32, %arg2: i32) -> (i32, i32, i32, i32) {
    %c0_i32 = arith.constant 0 : i32
    %c0_i32_0 = arith.constant 0 : i32
    return %arg0, %arg1, %arg2, %c0_i32 : i32, i32, i32, i32
  }
}

module attributes {stable_mosaic.version = 11 : i64} {
  func.func @_attn_out_ln_kernel(%arg0: i32, %arg1: i32, %arg2: memref<1x4x8x8xbf16, #tpu.memory_space<vmem>>, %arg3: memref<4x8x32xbf16, #tpu.memory_space<vmem>>, %arg4: memref<1x32xf32, #tpu.memory_space<vmem>>, %arg5: memref<1x8x32xf32, #tpu.memory_space<vmem>>, %arg6: memref<1x32xf32, #tpu.memory_space<vmem>>, %arg7: memref<1x32xf32, #tpu.memory_space<vmem>>, %arg8: memref<1x8x32xf32, #tpu.memory_space<vmem>>) attributes {dimension_semantics = [#tpu.dimension_semantics<parallel>, #tpu.dimension_semantics<parallel>], iteration_bounds = array<i64: 2, 1>, scalar_prefetch = 0 : i64, scratch_operands = 0 : i64, tpu.core_type = #tpu.core_type<tc>, window_params = [{transform_indices = @transform_0, window_bounds = array<i64: 1, 4, 8, 8>}, {pipeline_mode = #tpu.pipeline_mode<synchronous>, transform_indices = @transform_1, window_bounds = array<i64: 4, 8, 32>}, {pipeline_mode = #tpu.pipeline_mode<synchronous>, transform_indices = @transform_2, window_bounds = array<i64: 1, 32>}, {transform_indices = @transform_3, window_bounds = array<i64: 1, 8, 32>}, {pipeline_mode = #tpu.pipeline_mode<synchronous>, transform_indices = @transform_4, window_bounds = array<i64: 1, 32>}, {pipeline_mode = #tpu.pipeline_mode<synchronous>, transform_indices = @transform_5, window_bounds = array<i64: 1, 32>}, {transform_indices = @transform_6, window_bounds = array<i64: 1, 8, 32>}]} {
    %c0 = arith.constant 0 : index
    %c0_0 = arith.constant 0 : index
    %c0_1 = arith.constant 0 : index
    %c0_2 = arith.constant 0 : index
    %0 = vector.load %arg2[%c0, %c0_0, %c0_1, %c0_2] : memref<1x4x8x8xbf16, #tpu.memory_space<vmem>>, vector<1x1x8x8xbf16>
    %1 = vector.shape_cast %0 : vector<1x1x8x8xbf16> to vector<8x8xbf16>
    %c0_3 = arith.constant 0 : index
    %c0_4 = arith.constant 0 : index
    %c0_5 = arith.constant 0 : index
    %2 = vector.load %arg3[%c0_3, %c0_4, %c0_5] : memref<4x8x32xbf16, #tpu.memory_space<vmem>>, vector<1x8x32xbf16>
    %3 = vector.shape_cast %2 : vector<1x8x32xbf16> to vector<8x32xbf16>
    %cst = arith.constant dense<0.000000e+00> : vector<8x32xf32>
    %4 = tpu.matmul %1, %3, %cst {dimension_numbers = #tpu.dot_dimension_numbers<[1], [0], [0], [1], [0, 0, 1, 1], [], []>} : vector<8x8xbf16>, vector<8x32xbf16>, vector<8x32xf32> -> vector<8x32xf32>
    %c0_6 = arith.constant 0 : index
    %c1 = arith.constant 1 : index
    %c0_7 = arith.constant 0 : index
    %c0_8 = arith.constant 0 : index
    %5 = vector.load %arg2[%c0_6, %c1, %c0_7, %c0_8] : memref<1x4x8x8xbf16, #tpu.memory_space<vmem>>, vector<1x1x8x8xbf16>
    %6 = vector.shape_cast %5 : vector<1x1x8x8xbf16> to vector<8x8xbf16>
    %c1_9 = arith.constant 1 : index
    %c0_10 = arith.constant 0 : index
    %c0_11 = arith.constant 0 : index
    %7 = vector.load %arg3[%c1_9, %c0_10, %c0_11] : memref<4x8x32xbf16, #tpu.memory_space<vmem>>, vector<1x8x32xbf16>
    %8 = vector.shape_cast %7 : vector<1x8x32xbf16> to vector<8x32xbf16>
    %cst_12 = arith.constant dense<0.000000e+00> : vector<8x32xf32>
    %9 = tpu.matmul %6, %8, %cst_12 {dimension_numbers = #tpu.dot_dimension_numbers<[1], [0], [0], [1], [0, 0, 1, 1], [], []>} : vector<8x8xbf16>, vector<8x32xbf16>, vector<8x32xf32> -> vector<8x32xf32>
    %10 = arith.addf %4, %9 : vector<8x32xf32>
    %c0_13 = arith.constant 0 : index
    %c2 = arith.constant 2 : index
    %c0_14 = arith.constant 0 : index
    %c0_15 = arith.constant 0 : index
    %11 = vector.load %arg2[%c0_13, %c2, %c0_14, %c0_15] : memref<1x4x8x8xbf16, #tpu.memory_space<vmem>>, vector<1x1x8x8xbf16>
    %12 = vector.shape_cast %11 : vector<1x1x8x8xbf16> to vector<8x8xbf16>
    %c2_16 = arith.constant 2 : index
    %c0_17 = arith.constant 0 : index
    %c0_18 = arith.constant 0 : index
    %13 = vector.load %arg3[%c2_16, %c0_17, %c0_18] : memref<4x8x32xbf16, #tpu.memory_space<vmem>>, vector<1x8x32xbf16>
    %14 = vector.shape_cast %13 : vector<1x8x32xbf16> to vector<8x32xbf16>
    %cst_19 = arith.constant dense<0.000000e+00> : vector<8x32xf32>
    %15 = tpu.matmul %12, %14, %cst_19 {dimension_numbers = #tpu.dot_dimension_numbers<[1], [0], [0], [1], [0, 0, 1, 1], [], []>} : vector<8x8xbf16>, vector<8x32xbf16>, vector<8x32xf32> -> vector<8x32xf32>
    %16 = arith.addf %10, %15 : vector<8x32xf32>
    %c0_20 = arith.constant 0 : index
    %c3 = arith.constant 3 : index
    %c0_21 = arith.constant 0 : index
    %c0_22 = arith.constant 0 : index
    %17 = vector.load %arg2[%c0_20, %c3, %c0_21, %c0_22] : memref<1x4x8x8xbf16, #tpu.memory_space<vmem>>, vector<1x1x8x8xbf16>
    %18 = vector.shape_cast %17 : vector<1x1x8x8xbf16> to vector<8x8xbf16>
    %c3_23 = arith.constant 3 : index
    %c0_24 = arith.constant 0 : index
    %c0_25 = arith.constant 0 : index
    %19 = vector.load %arg3[%c3_23, %c0_24, %c0_25] : memref<4x8x32xbf16, #tpu.memory_space<vmem>>, vector<1x8x32xbf16>
    %20 = vector.shape_cast %19 : vector<1x8x32xbf16> to vector<8x32xbf16>
    %cst_26 = arith.constant dense<0.000000e+00> : vector<8x32xf32>
    %21 = tpu.matmul %18, %20, %cst_26 {dimension_numbers = #tpu.dot_dimension_numbers<[1], [0], [0], [1], [0, 0, 1, 1], [], []>} : vector<8x8xbf16>, vector<8x32xbf16>, vector<8x32xf32> -> vector<8x32xf32>
    %22 = arith.addf %16, %21 : vector<8x32xf32>
    %c0_27 = arith.constant 0 : index
    %c0_28 = arith.constant 0 : index
    %23 = vector.load %arg4[%c0_27, %c0_28] : memref<1x32xf32, #tpu.memory_space<vmem>>, vector<1x32xf32>
    %24 = vector.broadcast %23 : vector<1x32xf32> to vector<8x32xf32>
    %25 = arith.addf %22, %24 : vector<8x32xf32>
    %c0_29 = arith.constant 0 : index
    %c0_30 = arith.constant 0 : index
    %c0_31 = arith.constant 0 : index
    %26 = vector.load %arg5[%c0_29, %c0_30, %c0_31] : memref<1x8x32xf32, #tpu.memory_space<vmem>>, vector<1x8x32xf32>
    %27 = vector.shape_cast %26 : vector<1x8x32xf32> to vector<8x32xf32>
    %28 = arith.addf %25, %27 : vector<8x32xf32>
    %c0_32 = arith.constant 0 : index
    %c0_33 = arith.constant 0 : index
    %29 = vector.load %arg6[%c0_32, %c0_33] : memref<1x32xf32, #tpu.memory_space<vmem>>, vector<1x32xf32>
    %c0_34 = arith.constant 0 : index
    %c0_35 = arith.constant 0 : index
    %30 = vector.load %arg7[%c0_34, %c0_35] : memref<1x32xf32, #tpu.memory_space<vmem>>, vector<1x32xf32>
    %cst_36 = arith.constant dense<0.000000e+00> : vector<8xf32>
    %31 = vector.multi_reduction <add>, %28, %cst_36 [1] : vector<8x32xf32> to vector<8xf32>
    %32 = vector.shape_cast %31 : vector<8xf32> to vector<8x1xf32>
    %cst_37 = arith.constant 3.200000e+01 : f32
    %33 = vector.broadcast %cst_37 : f32 to vector<8x1xf32>
    %34 = arith.divf %32, %33 : vector<8x1xf32>
    %35 = vector.broadcast %34 : vector<8x1xf32> to vector<8x32xf32>
    %36 = arith.subf %28, %35 : vector<8x32xf32>
    %37 = arith.mulf %36, %36 : vector<8x32xf32>
    %cst_38 = arith.constant dense<0.000000e+00> : vector<8xf32>
    %38 = vector.multi_reduction <add>, %37, %cst_38 [1] : vector<8x32xf32> to vector<8xf32>
    %39 = vector.shape_cast %38 : vector<8xf32> to vector<8x1xf32>
    %cst_39 = arith.constant 3.200000e+01 : f32
    %40 = vector.broadcast %cst_39 : f32 to vector<8x1xf32>
    %41 = arith.divf %39, %40 : vector<8x1xf32>
    %42 = vector.broadcast %34 : vector<8x1xf32> to vector<8x32xf32>
    %43 = arith.subf %28, %42 : vector<8x32xf32>
    %cst_40 = arith.constant 9.99999974E-6 : f32
    %44 = vector.broadcast %cst_40 : f32 to vector<8x1xf32>
    %45 = arith.addf %41, %44 : vector<8x1xf32>
    %46 = math.rsqrt %45 : vector<8x1xf32>
    %47 = vector.broadcast %46 : vector<8x1xf32> to vector<8x32xf32>
    %48 = arith.mulf %43, %47 : vector<8x32xf32>
    %49 = vector.broadcast %29 : vector<1x32xf32> to vector<8x32xf32>
    %50 = arith.mulf %48, %49 : vector<8x32xf32>
    %51 = vector.broadcast %30 : vector<1x32xf32> to vector<8x32xf32>
    %52 = arith.addf %50, %51 : vector<8x32xf32>
    %c0_41 = arith.constant 0 : index
    %c0_42 = arith.constant 0 : index
    %c0_43 = arith.constant 0 : index
    %53 = vector.load %arg8[%c0_41, %c0_42, %c0_43] : memref<1x8x32xf32, #tpu.memory_space<vmem>>, vector<1x8x32xf32>
    %54 = vector.shape_cast %53 : vector<1x8x32xf32> to vector<8x32xf32>
    %55 = vector.shape_cast %52 : vector<8x32xf32> to vector<1x8x32xf32>
    tpu.vector_store %arg8[%c0_41, %c0_42, %c0_43], %55 {strides = array<i32>} : memref<1x8x32xf32, #tpu.memory_space<vmem>>, vector<1x8x32xf32>,
    return
  }
  func.func @transform_0(%arg0: i32, %arg1: i32) -> (i32, i32, i32, i32) {
    %c0_i32 = arith.constant 0 : i32
    %c0_i32_0 = arith.constant 0 : i32
    %c0_i32_1 = arith.constant 0 : i32
    return %arg0, %c0_i32, %arg1, %c0_i32_0 : i32, i32, i32, i32
  }
  func.func @transform_1(%arg0: i32, %arg1: i32) -> (i32, i32, i32) {
    %c0_i32 = arith.constant 0 : i32
    %c0_i32_0 = arith.constant 0 : i32
    %c0_i32_1 = arith.constant 0 : i32
    %c0_i32_2 = arith.constant 0 : i32
    return %c0_i32, %c0_i32_0, %c0_i32_1 : i32, i32, i32
  }
  func.func @transform_2(%arg0: i32, %arg1: i32) -> (i32, i32) {
    %c0_i32 = arith.constant 0 : i32
    %c0_i32_0 = arith.constant 0 : i32
    %c0_i32_1 = arith.constant 0 : i32
    return %c0_i32, %c0_i32_0 : i32, i32
  }
  func.func @transform_3(%arg0: i32, %arg1: i32) -> (i32, i32, i32) {
    %c0_i32 = arith.constant 0 : i32
    %c0_i32_0 = arith.constant 0 : i32
    return %arg0, %arg1, %c0_i32 : i32, i32, i32
  }
  func.func @transform_4(%arg0: i32, %arg1: i32) -> (i32, i32) {
    %c0_i32 = arith.constant 0 : i32
    %c0_i32_0 = arith.constant 0 : i32
    %c0_i32_1 = arith.constant 0 : i32
    return %c0_i32, %c0_i32_0 : i32, i32
  }
  func.func @transform_5(%arg0: i32, %arg1: i32) -> (i32, i32) {
    %c0_i32 = arith.constant 0 : i32
    %c0_i32_0 = arith.constant 0 : i32
    %c0_i32_1 = arith.constant 0 : i32
    return %c0_i32, %c0_i32_0 : i32, i32
  }
  func.func @transform_6(%arg0: i32, %arg1: i32) -> (i32, i32, i32) {
    %c0_i32 = arith.constant 0 : i32
    %c0_i32_0 = arith.constant 0 : i32
    return %arg0, %arg1, %c0_i32 : i32, i32, i32
  }
}

module attributes {stable_mosaic.version = 11 : i64} {
  func.func @_ffn_ln_kernel(%arg0: i32, %arg1: i32, %arg2: memref<16x32xf32, #tpu.memory_space<vmem>>, %arg3: memref<32x64xbf16, #tpu.memory_space<vmem>>, %arg4: memref<1x64xf32, #tpu.memory_space<vmem>>, %arg5: memref<64x32xbf16, #tpu.memory_space<vmem>>, %arg6: memref<1x32xf32, #tpu.memory_space<vmem>>, %arg7: memref<1x32xf32, #tpu.memory_space<vmem>>, %arg8: memref<1x32xf32, #tpu.memory_space<vmem>>, %arg9: memref<16x32xf32, #tpu.memory_space<vmem>>, %arg10: memref<16x32xf32, #tpu.memory_space<vmem>>) attributes {dimension_semantics = [#tpu.dimension_semantics<parallel>, #tpu.dimension_semantics<arbitrary>], iteration_bounds = array<i64: 1, 1>, scalar_prefetch = 0 : i64, scratch_operands = 1 : i64, tpu.core_type = #tpu.core_type<tc>, window_params = [{transform_indices = @transform_0, window_bounds = array<i64: 16, 32>}, {transform_indices = @transform_1, window_bounds = array<i64: 32, 64>}, {transform_indices = @transform_2, window_bounds = array<i64: 1, 64>}, {transform_indices = @transform_3, window_bounds = array<i64: 64, 32>}, {pipeline_mode = #tpu.pipeline_mode<synchronous>, transform_indices = @transform_4, window_bounds = array<i64: 1, 32>}, {pipeline_mode = #tpu.pipeline_mode<synchronous>, transform_indices = @transform_5, window_bounds = array<i64: 1, 32>}, {pipeline_mode = #tpu.pipeline_mode<synchronous>, transform_indices = @transform_6, window_bounds = array<i64: 1, 32>}, {transform_indices = @transform_7, window_bounds = array<i64: 16, 32>}]} {
    %c0_i32 = arith.constant 0 : i32
    %0 = arith.cmpi eq, %arg1, %c0_i32 : i32
    %1 = arith.extui %0 : i1 to i32
    %c0_i32_0 = arith.constant 0 : i32
    %2 = arith.cmpi ne, %1, %c0_i32_0 : i32
    scf.if %2 {
      %cst_18 = arith.constant 0.000000e+00 : f32
      %27 = vector.broadcast %cst_18 : f32 to vector<16x32xf32>
      %c0_19 = arith.constant 0 : index
      %c0_20 = arith.constant 0 : index
      %28 = vector.load %arg10[%c0_19, %c0_20] : memref<16x32xf32, #tpu.memory_space<vmem>>, vector<16x32xf32>
      tpu.vector_store %arg10[%c0_19, %c0_20], %27 {strides = array<i32>} : memref<16x32xf32, #tpu.memory_space<vmem>>, vector<16x32xf32>,
    } else {
    }
    %c0 = arith.constant 0 : index
    %c0_1 = arith.constant 0 : index
    %3 = vector.load %arg2[%c0, %c0_1] : memref<16x32xf32, #tpu.memory_space<vmem>>, vector<16x32xf32>
    %4 = arith.truncf %3 : vector<16x32xf32> to vector<16x32xbf16>
    %c0_2 = arith.constant 0 : index
    %c0_3 = arith.constant 0 : index
    %5 = vector.load %arg3[%c0_2, %c0_3] : memref<32x64xbf16, #tpu.memory_space<vmem>>, vector<32x64xbf16>
    %cst = arith.constant dense<0.000000e+00> : vector<16x64xf32>
    %6 = tpu.matmul %4, %5, %cst {dimension_numbers = #tpu.dot_dimension_numbers<[1], [0], [0], [1], [0, 0, 1, 1], [], []>} : vector<16x32xbf16>, vector<32x64xbf16>, vector<16x64xf32> -> vector<16x64xf32>
    %c0_4 = arith.constant 0 : index
    %c0_5 = arith.constant 0 : index
    %7 = vector.load %arg4[%c0_4, %c0_5] : memref<1x64xf32, #tpu.memory_space<vmem>>, vector<1x64xf32>
    %8 = vector.broadcast %7 : vector<1x64xf32> to vector<16x64xf32>
    %9 = arith.addf %6, %8 : vector<16x64xf32>
    %cst_6 = arith.constant 5.000000e-01 : f32
    %10 = vector.broadcast %cst_6 : f32 to vector<16x64xf32>
    %11 = arith.mulf %10, %9 : vector<16x64xf32>
    %cst_7 = arith.constant 0.707106769 : f32
    %12 = vector.broadcast %cst_7 : f32 to vector<16x64xf32>
    %13 = arith.mulf %9, %12 : vector<16x64xf32>
    %14 = math.erf %13 : vector<16x64xf32>
    %cst_8 = arith.constant 1.000000e+00 : f32
    %15 = vector.broadcast %cst_8 : f32 to vector<16x64xf32>
    %16 = arith.addf %15, %14 : vector<16x64xf32>
    %17 = arith.mulf %11, %16 : vector<16x64xf32>
    %c0_9 = arith.constant 0 : index
    %c0_10 = arith.constant 0 : index
    %18 = vector.load %arg10[%c0_9, %c0_10] : memref<16x32xf32, #tpu.memory_space<vmem>>, vector<16x32xf32>
    %19 = arith.truncf %17 : vector<16x64xf32> to vector<16x64xbf16>
    %c0_11 = arith.constant 0 : index
    %c0_12 = arith.constant 0 : index
    %20 = vector.load %arg5[%c0_11, %c0_12] : memref<64x32xbf16, #tpu.memory_space<vmem>>, vector<64x32xbf16>
    %cst_13 = arith.constant dense<0.000000e+00> : vector<16x32xf32>
    %21 = tpu.matmul %19, %20, %cst_13 {dimension_numbers = #tpu.dot_dimension_numbers<[1], [0], [0], [1], [0, 0, 1, 1], [], []>} : vector<16x64xbf16>, vector<64x32xbf16>, vector<16x32xf32> -> vector<16x32xf32>
    %22 = arith.addf %18, %21 : vector<16x32xf32>
    %c0_14 = arith.constant 0 : index
    %c0_15 = arith.constant 0 : index
    %23 = vector.load %arg10[%c0_14, %c0_15] : memref<16x32xf32, #tpu.memory_space<vmem>>, vector<16x32xf32>
    tpu.vector_store %arg10[%c0_14, %c0_15], %22 {strides = array<i32>} : memref<16x32xf32, #tpu.memory_space<vmem>>, vector<16x32xf32>,
    %c0_i32_16 = arith.constant 0 : i32
    %24 = arith.cmpi eq, %arg1, %c0_i32_16 : i32
    %25 = arith.extui %24 : i1 to i32
    %c0_i32_17 = arith.constant 0 : i32
    %26 = arith.cmpi ne, %25, %c0_i32_17 : i32
    scf.if %26 {
      %c0_18 = arith.constant 0 : index
      %c0_19 = arith.constant 0 : index
      %27 = vector.load %arg10[%c0_18, %c0_19] : memref<16x32xf32, #tpu.memory_space<vmem>>, vector<16x32xf32>
      %c0_20 = arith.constant 0 : index
      %c0_21 = arith.constant 0 : index
      %28 = vector.load %arg6[%c0_20, %c0_21] : memref<1x32xf32, #tpu.memory_space<vmem>>, vector<1x32xf32>
      %29 = vector.broadcast %28 : vector<1x32xf32> to vector<16x32xf32>
      %30 = arith.addf %27, %29 : vector<16x32xf32>
      %31 = arith.addf %30, %3 : vector<16x32xf32>
      %c0_22 = arith.constant 0 : index
      %c0_23 = arith.constant 0 : index
      %32 = vector.load %arg7[%c0_22, %c0_23] : memref<1x32xf32, #tpu.memory_space<vmem>>, vector<1x32xf32>
      %c0_24 = arith.constant 0 : index
      %c0_25 = arith.constant 0 : index
      %33 = vector.load %arg8[%c0_24, %c0_25] : memref<1x32xf32, #tpu.memory_space<vmem>>, vector<1x32xf32>
      %cst_26 = arith.constant dense<0.000000e+00> : vector<16xf32>
      %34 = vector.multi_reduction <add>, %31, %cst_26 [1] : vector<16x32xf32> to vector<16xf32>
      %35 = vector.shape_cast %34 : vector<16xf32> to vector<16x1xf32>
      %cst_27 = arith.constant 3.200000e+01 : f32
      %36 = vector.broadcast %cst_27 : f32 to vector<16x1xf32>
      %37 = arith.divf %35, %36 : vector<16x1xf32>
      %38 = vector.broadcast %37 : vector<16x1xf32> to vector<16x32xf32>
      %39 = arith.subf %31, %38 : vector<16x32xf32>
      %40 = arith.mulf %39, %39 : vector<16x32xf32>
      %cst_28 = arith.constant dense<0.000000e+00> : vector<16xf32>
      %41 = vector.multi_reduction <add>, %40, %cst_28 [1] : vector<16x32xf32> to vector<16xf32>
      %42 = vector.shape_cast %41 : vector<16xf32> to vector<16x1xf32>
      %cst_29 = arith.constant 3.200000e+01 : f32
      %43 = vector.broadcast %cst_29 : f32 to vector<16x1xf32>
      %44 = arith.divf %42, %43 : vector<16x1xf32>
      %45 = vector.broadcast %37 : vector<16x1xf32> to vector<16x32xf32>
      %46 = arith.subf %31, %45 : vector<16x32xf32>
      %cst_30 = arith.constant 9.99999974E-6 : f32
      %47 = vector.broadcast %cst_30 : f32 to vector<16x1xf32>
      %48 = arith.addf %44, %47 : vector<16x1xf32>
      %49 = math.rsqrt %48 : vector<16x1xf32>
      %50 = vector.broadcast %49 : vector<16x1xf32> to vector<16x32xf32>
      %51 = arith.mulf %46, %50 : vector<16x32xf32>
      %52 = vector.broadcast %32 : vector<1x32xf32> to vector<16x32xf32>
      %53 = arith.mulf %51, %52 : vector<16x32xf32>
      %54 = vector.broadcast %33 : vector<1x32xf32> to vector<16x32xf32>
      %55 = arith.addf %53, %54 : vector<16x32xf32>
      %c0_31 = arith.constant 0 : index
      %c0_32 = arith.constant 0 : index
      %56 = vector.load %arg9[%c0_31, %c0_32] : memref<16x32xf32, #tpu.memory_space<vmem>>, vector<16x32xf32>
      tpu.vector_store %arg9[%c0_31, %c0_32], %55 {strides = array<i32>} : memref<16x32xf32, #tpu.memory_space<vmem>>, vector<16x32xf32>,
    } else {
    }
    return
  }
  func.func @transform_0(%arg0: i32, %arg1: i32) -> (i32, i32) {
    %c0_i32 = arith.constant 0 : i32
    %c0_i32_0 = arith.constant 0 : i32
    return %arg0, %c0_i32 : i32, i32
  }
  func.func @transform_1(%arg0: i32, %arg1: i32) -> (i32, i32) {
    %c0_i32 = arith.constant 0 : i32
    %c0_i32_0 = arith.constant 0 : i32
    return %c0_i32, %arg1 : i32, i32
  }
  func.func @transform_2(%arg0: i32, %arg1: i32) -> (i32, i32) {
    %c0_i32 = arith.constant 0 : i32
    %c0_i32_0 = arith.constant 0 : i32
    return %c0_i32, %arg1 : i32, i32
  }
  func.func @transform_3(%arg0: i32, %arg1: i32) -> (i32, i32) {
    %c0_i32 = arith.constant 0 : i32
    %c0_i32_0 = arith.constant 0 : i32
    return %arg1, %c0_i32 : i32, i32
  }
  func.func @transform_4(%arg0: i32, %arg1: i32) -> (i32, i32) {
    %c0_i32 = arith.constant 0 : i32
    %c0_i32_0 = arith.constant 0 : i32
    %c0_i32_1 = arith.constant 0 : i32
    return %c0_i32, %c0_i32_0 : i32, i32
  }
  func.func @transform_5(%arg0: i32, %arg1: i32) -> (i32, i32) {
    %c0_i32 = arith.constant 0 : i32
    %c0_i32_0 = arith.constant 0 : i32
    %c0_i32_1 = arith.constant 0 : i32
    return %c0_i32, %c0_i32_0 : i32, i32
  }
  func.func @transform_6(%arg0: i32, %arg1: i32) -> (i32, i32) {
    %c0_i32 = arith.constant 0 : i32
    %c0_i32_0 = arith.constant 0 : i32
    %c0_i32_1 = arith.constant 0 : i32
    return %c0_i32, %c0_i32_0 : i32, i32
  }
  func.func @transform_7(%arg0: i32, %arg1: i32) -> (i32, i32) {
    %c0_i32 = arith.constant 0 : i32
    %c0_i32_0 = arith.constant 0 : i32
    return %arg0, %c0_i32 : i32, i32
  }
}

module attributes {stable_mosaic.version = 11 : i64} {
  func.func @_linear_ln_kernel(%arg0: i32, %arg1: i32, %arg2: memref<16x32xf32, #tpu.memory_space<vmem>>, %arg3: memref<32x16xbf16, #tpu.memory_space<vmem>>, %arg4: memref<1x16xf32, #tpu.memory_space<vmem>>, %arg5: memref<1x16xf32, #tpu.memory_space<vmem>>, %arg6: memref<1x16xf32, #tpu.memory_space<vmem>>, %arg7: memref<16x16xf32, #tpu.memory_space<vmem>>, %arg8: memref<16x16xf32, #tpu.memory_space<vmem>>) attributes {dimension_semantics = [#tpu.dimension_semantics<parallel>, #tpu.dimension_semantics<arbitrary>], iteration_bounds = array<i64: 1, 1>, scalar_prefetch = 0 : i64, scratch_operands = 1 : i64, tpu.core_type = #tpu.core_type<tc>, window_params = [{transform_indices = @transform_0, window_bounds = array<i64: 16, 32>}, {transform_indices = @transform_1, window_bounds = array<i64: 32, 16>}, {pipeline_mode = #tpu.pipeline_mode<synchronous>, transform_indices = @transform_2, window_bounds = array<i64: 1, 16>}, {pipeline_mode = #tpu.pipeline_mode<synchronous>, transform_indices = @transform_3, window_bounds = array<i64: 1, 16>}, {pipeline_mode = #tpu.pipeline_mode<synchronous>, transform_indices = @transform_4, window_bounds = array<i64: 1, 16>}, {transform_indices = @transform_5, window_bounds = array<i64: 16, 16>}]} {
    %c0_i32 = arith.constant 0 : i32
    %0 = arith.cmpi eq, %arg1, %c0_i32 : i32
    %1 = arith.extui %0 : i1 to i32
    %c0_i32_0 = arith.constant 0 : i32
    %2 = arith.cmpi ne, %1, %c0_i32_0 : i32
    scf.if %2 {
      %cst_10 = arith.constant 0.000000e+00 : f32
      %13 = vector.broadcast %cst_10 : f32 to vector<16x16xf32>
      %c0_11 = arith.constant 0 : index
      %c0_12 = arith.constant 0 : index
      %14 = vector.load %arg8[%c0_11, %c0_12] : memref<16x16xf32, #tpu.memory_space<vmem>>, vector<16x16xf32>
      tpu.vector_store %arg8[%c0_11, %c0_12], %13 {strides = array<i32>} : memref<16x16xf32, #tpu.memory_space<vmem>>, vector<16x16xf32>,
    } else {
    }
    %c0 = arith.constant 0 : index
    %c0_1 = arith.constant 0 : index
    %3 = vector.load %arg8[%c0, %c0_1] : memref<16x16xf32, #tpu.memory_space<vmem>>, vector<16x16xf32>
    %c0_2 = arith.constant 0 : index
    %c0_3 = arith.constant 0 : index
    %4 = vector.load %arg2[%c0_2, %c0_3] : memref<16x32xf32, #tpu.memory_space<vmem>>, vector<16x32xf32>
    %5 = arith.truncf %4 : vector<16x32xf32> to vector<16x32xbf16>
    %c0_4 = arith.constant 0 : index
    %c0_5 = arith.constant 0 : index
    %6 = vector.load %arg3[%c0_4, %c0_5] : memref<32x16xbf16, #tpu.memory_space<vmem>>, vector<32x16xbf16>
    %cst = arith.constant dense<0.000000e+00> : vector<16x16xf32>
    %7 = tpu.matmul %5, %6, %cst {dimension_numbers = #tpu.dot_dimension_numbers<[1], [0], [0], [1], [0, 0, 1, 1], [], []>} : vector<16x32xbf16>, vector<32x16xbf16>, vector<16x16xf32> -> vector<16x16xf32>
    %8 = arith.addf %3, %7 : vector<16x16xf32>
    %c0_6 = arith.constant 0 : index
    %c0_7 = arith.constant 0 : index
    %9 = vector.load %arg8[%c0_6, %c0_7] : memref<16x16xf32, #tpu.memory_space<vmem>>, vector<16x16xf32>
    tpu.vector_store %arg8[%c0_6, %c0_7], %8 {strides = array<i32>} : memref<16x16xf32, #tpu.memory_space<vmem>>, vector<16x16xf32>,
    %c0_i32_8 = arith.constant 0 : i32
    %10 = arith.cmpi eq, %arg1, %c0_i32_8 : i32
    %11 = arith.extui %10 : i1 to i32
    %c0_i32_9 = arith.constant 0 : i32
    %12 = arith.cmpi ne, %11, %c0_i32_9 : i32
    scf.if %12 {
      %c0_10 = arith.constant 0 : index
      %c0_11 = arith.constant 0 : index
      %13 = vector.load %arg8[%c0_10, %c0_11] : memref<16x16xf32, #tpu.memory_space<vmem>>, vector<16x16xf32>
      %c0_12 = arith.constant 0 : index
      %c0_13 = arith.constant 0 : index
      %14 = vector.load %arg4[%c0_12, %c0_13] : memref<1x16xf32, #tpu.memory_space<vmem>>, vector<1x16xf32>
      %15 = vector.broadcast %14 : vector<1x16xf32> to vector<16x16xf32>
      %16 = arith.addf %13, %15 : vector<16x16xf32>
      %cst_14 = arith.constant 5.000000e-01 : f32
      %17 = vector.broadcast %cst_14 : f32 to vector<16x16xf32>
      %18 = arith.mulf %17, %16 : vector<16x16xf32>
      %cst_15 = arith.constant 0.707106769 : f32
      %19 = vector.broadcast %cst_15 : f32 to vector<16x16xf32>
      %20 = arith.mulf %16, %19 : vector<16x16xf32>
      %21 = math.erf %20 : vector<16x16xf32>
      %cst_16 = arith.constant 1.000000e+00 : f32
      %22 = vector.broadcast %cst_16 : f32 to vector<16x16xf32>
      %23 = arith.addf %22, %21 : vector<16x16xf32>
      %24 = arith.mulf %18, %23 : vector<16x16xf32>
      %c0_17 = arith.constant 0 : index
      %c0_18 = arith.constant 0 : index
      %25 = vector.load %arg5[%c0_17, %c0_18] : memref<1x16xf32, #tpu.memory_space<vmem>>, vector<1x16xf32>
      %c0_19 = arith.constant 0 : index
      %c0_20 = arith.constant 0 : index
      %26 = vector.load %arg6[%c0_19, %c0_20] : memref<1x16xf32, #tpu.memory_space<vmem>>, vector<1x16xf32>
      %cst_21 = arith.constant dense<0.000000e+00> : vector<16xf32>
      %27 = vector.multi_reduction <add>, %24, %cst_21 [1] : vector<16x16xf32> to vector<16xf32>
      %28 = vector.shape_cast %27 : vector<16xf32> to vector<16x1xf32>
      %cst_22 = arith.constant 1.600000e+01 : f32
      %29 = vector.broadcast %cst_22 : f32 to vector<16x1xf32>
      %30 = arith.divf %28, %29 : vector<16x1xf32>
      %31 = vector.broadcast %30 : vector<16x1xf32> to vector<16x16xf32>
      %32 = arith.subf %24, %31 : vector<16x16xf32>
      %33 = arith.mulf %32, %32 : vector<16x16xf32>
      %cst_23 = arith.constant dense<0.000000e+00> : vector<16xf32>
      %34 = vector.multi_reduction <add>, %33, %cst_23 [1] : vector<16x16xf32> to vector<16xf32>
      %35 = vector.shape_cast %34 : vector<16xf32> to vector<16x1xf32>
      %cst_24 = arith.constant 1.600000e+01 : f32
      %36 = vector.broadcast %cst_24 : f32 to vector<16x1xf32>
      %37 = arith.divf %35, %36 : vector<16x1xf32>
      %38 = vector.broadcast %30 : vector<16x1xf32> to vector<16x16xf32>
      %39 = arith.subf %24, %38 : vector<16x16xf32>
      %cst_25 = arith.constant 9.99999974E-6 : f32
      %40 = vector.broadcast %cst_25 : f32 to vector<16x1xf32>
      %41 = arith.addf %37, %40 : vector<16x1xf32>
      %42 = math.rsqrt %41 : vector<16x1xf32>
      %43 = vector.broadcast %42 : vector<16x1xf32> to vector<16x16xf32>
      %44 = arith.mulf %39, %43 : vector<16x16xf32>
      %45 = vector.broadcast %25 : vector<1x16xf32> to vector<16x16xf32>
      %46 = arith.mulf %44, %45 : vector<16x16xf32>
      %47 = vector.broadcast %26 : vector<1x16xf32> to vector<16x16xf32>
      %48 = arith.addf %46, %47 : vector<16x16xf32>
      %c0_26 = arith.constant 0 : index
      %c0_27 = arith.constant 0 : index
      %49 = vector.load %arg7[%c0_26, %c0_27] : memref<16x16xf32, #tpu.memory_space<vmem>>, vector<16x16xf32>
      tpu.vector_store %arg7[%c0_26, %c0_27], %48 {strides = array<i32>} : memref<16x16xf32, #tpu.memory_space<vmem>>, vector<16x16xf32>,
    } else {
    }
    return
  }
  func.func @transform_0(%arg0: i32, %arg1: i32) -> (i32, i32) {
    %c0_i32 = arith.constant 0 : i32
    return %arg0, %arg1 : i32, i32
  }
  func.func @transform_1(%arg0: i32, %arg1: i32) -> (i32, i32) {
    %c0_i32 = arith.constant 0 : i32
    %c0_i32_0 = arith.constant 0 : i32
    return %arg1, %c0_i32 : i32, i32
  }
  func.func @transform_2(%arg0: i32, %arg1: i32) -> (i32, i32) {
    %c0_i32 = arith.constant 0 : i32
    %c0_i32_0 = arith.constant 0 : i32
    %c0_i32_1 = arith.constant 0 : i32
    return %c0_i32, %c0_i32_0 : i32, i32
  }
  func.func @transform_3(%arg0: i32, %arg1: i32) -> (i32, i32) {
    %c0_i32 = arith.constant 0 : i32
    %c0_i32_0 = arith.constant 0 : i32
    %c0_i32_1 = arith.constant 0 : i32
    return %c0_i32, %c0_i32_0 : i32, i32
  }
  func.func @transform_4(%arg0: i32, %arg1: i32) -> (i32, i32) {
    %c0_i32 = arith.constant 0 : i32
    %c0_i32_0 = arith.constant 0 : i32
    %c0_i32_1 = arith.constant 0 : i32
    return %c0_i32, %c0_i32_0 : i32, i32
  }
  func.func @transform_5(%arg0: i32, %arg1: i32) -> (i32, i32) {
    %c0_i32 = arith.constant 0 : i32
    %c0_i32_0 = arith.constant 0 : i32
    return %arg0, %c0_i32 : i32, i32
  }
}

module attributes {stable_mosaic.version = 11 : i64} {
  func.func @_linear_kernel(%arg0: i32, %arg1: i32, %arg2: i32, %arg3: memref<16x16xf32, #tpu.memory_space<vmem>>, %arg4: memref<16x128xbf16, #tpu.memory_space<vmem>>, %arg5: memref<1x128xf32, #tpu.memory_space<vmem>>, %arg6: memref<16x128xf32, #tpu.memory_space<vmem>>, %arg7: memref<16x128xf32, #tpu.memory_space<vmem>>) attributes {dimension_semantics = [#tpu.dimension_semantics<parallel>, #tpu.dimension_semantics<parallel>, #tpu.dimension_semantics<arbitrary>], iteration_bounds = array<i64: 1, 1, 1>, scalar_prefetch = 0 : i64, scratch_operands = 1 : i64, tpu.core_type = #tpu.core_type<tc>, window_params = [{transform_indices = @transform_0, window_bounds = array<i64: 16, 16>}, {transform_indices = @transform_1, window_bounds = array<i64: 16, 128>}, {transform_indices = @transform_2, window_bounds = array<i64: 1, 128>}, {transform_indices = @transform_3, window_bounds = array<i64: 16, 128>}]} {
    %c0_i32 = arith.constant 0 : i32
    %0 = arith.cmpi eq, %arg2, %c0_i32 : i32
    %1 = arith.extui %0 : i1 to i32
    %c0_i32_0 = arith.constant 0 : i32
    %2 = arith.cmpi ne, %1, %c0_i32_0 : i32
    scf.if %2 {
      %cst_13 = arith.constant 0.000000e+00 : f32
      %24 = vector.broadcast %cst_13 : f32 to vector<16x128xf32>
      %c0_14 = arith.constant 0 : index
      %c0_15 = arith.constant 0 : index
      %25 = vector.load %arg7[%c0_14, %c0_15] : memref<16x128xf32, #tpu.memory_space<vmem>>, vector<16x128xf32>
      tpu.vector_store %arg7[%c0_14, %c0_15], %24 {strides = array<i32>} : memref<16x128xf32, #tpu.memory_space<vmem>>, vector<16x128xf32>,
    } else {
    }
    %c0 = arith.constant 0 : index
    %c0_1 = arith.constant 0 : index
    %3 = vector.load %arg3[%c0, %c0_1] : memref<16x16xf32, #tpu.memory_space<vmem>>, vector<16x16xf32>
    %cst = arith.constant 2.000000e+01 : f32
    %4 = vector.broadcast %cst : f32 to vector<16x16xf32>
    %5 = arith.minimumf %3, %4 : vector<16x16xf32>
    %cst_2 = arith.constant 2.000000e+01 : f32
    %6 = vector.broadcast %cst_2 : f32 to vector<16x16xf32>
    %7 = arith.cmpf ogt, %3, %6 : vector<16x16xf32>
    %8 = math.exp %5 : vector<16x16xf32>
    %cst_3 = arith.constant 1.000000e+00 : f32
    %9 = vector.broadcast %cst_3 : f32 to vector<16x16xf32>
    %10 = arith.addf %9, %8 : vector<16x16xf32>
    %11 = math.log %10 : vector<16x16xf32>
    %12 = arith.select %7, %3, %11 : vector<16x16xi1>, vector<16x16xf32>
    %13 = math.tanh %12 : vector<16x16xf32>
    %14 = arith.mulf %3, %13 : vector<16x16xf32>
    %c0_4 = arith.constant 0 : index
    %c0_5 = arith.constant 0 : index
    %15 = vector.load %arg7[%c0_4, %c0_5] : memref<16x128xf32, #tpu.memory_space<vmem>>, vector<16x128xf32>
    %16 = arith.truncf %14 : vector<16x16xf32> to vector<16x16xbf16>
    %c0_6 = arith.constant 0 : index
    %c0_7 = arith.constant 0 : index
    %17 = vector.load %arg4[%c0_6, %c0_7] : memref<16x128xbf16, #tpu.memory_space<vmem>>, vector<16x128xbf16>
    %cst_8 = arith.constant dense<0.000000e+00> : vector<16x128xf32>
    %18 = tpu.matmul %16, %17, %cst_8 {dimension_numbers = #tpu.dot_dimension_numbers<[1], [0], [0], [1], [0, 0, 1, 1], [], []>} : vector<16x16xbf16>, vector<16x128xbf16>, vector<16x128xf32> -> vector<16x128xf32>
    %19 = arith.addf %15, %18 : vector<16x128xf32>
    %c0_9 = arith.constant 0 : index
    %c0_10 = arith.constant 0 : index
    %20 = vector.load %arg7[%c0_9, %c0_10] : memref<16x128xf32, #tpu.memory_space<vmem>>, vector<16x128xf32>
    tpu.vector_store %arg7[%c0_9, %c0_10], %19 {strides = array<i32>} : memref<16x128xf32, #tpu.memory_space<vmem>>, vector<16x128xf32>,
    %c0_i32_11 = arith.constant 0 : i32
    %21 = arith.cmpi eq, %arg2, %c0_i32_11 : i32
    %22 = arith.extui %21 : i1 to i32
    %c0_i32_12 = arith.constant 0 : i32
    %23 = arith.cmpi ne, %22, %c0_i32_12 : i32
    scf.if %23 {
      %c0_13 = arith.constant 0 : index
      %c0_14 = arith.constant 0 : index
      %24 = vector.load %arg7[%c0_13, %c0_14] : memref<16x128xf32, #tpu.memory_space<vmem>>, vector<16x128xf32>
      %c0_15 = arith.constant 0 : index
      %c0_16 = arith.constant 0 : index
      %25 = vector.load %arg5[%c0_15, %c0_16] : memref<1x128xf32, #tpu.memory_space<vmem>>, vector<1x128xf32>
      %26 = vector.broadcast %25 : vector<1x128xf32> to vector<16x128xf32>
      %27 = arith.addf %24, %26 : vector<16x128xf32>
      %c0_17 = arith.constant 0 : index
      %c0_18 = arith.constant 0 : index
      %28 = vector.load %arg6[%c0_17, %c0_18] : memref<16x128xf32, #tpu.memory_space<vmem>>, vector<16x128xf32>
      tpu.vector_store %arg6[%c0_17, %c0_18], %27 {strides = array<i32>} : memref<16x128xf32, #tpu.memory_space<vmem>>, vector<16x128xf32>,
    } else {
    }
    return
  }
  func.func @transform_0(%arg0: i32, %arg1: i32, %arg2: i32) -> (i32, i32) {
    %c0_i32 = arith.constant 0 : i32
    return %arg0, %arg2 : i32, i32
  }
  func.func @transform_1(%arg0: i32, %arg1: i32, %arg2: i32) -> (i32, i32) {
    %c0_i32 = arith.constant 0 : i32
    return %arg2, %arg1 : i32, i32
  }
  func.func @transform_2(%arg0: i32, %arg1: i32, %arg2: i32) -> (i32, i32) {
    %c0_i32 = arith.constant 0 : i32
    %c0_i32_0 = arith.constant 0 : i32
    return %c0_i32, %arg1 : i32, i32
  }
  func.func @transform_3(%arg0: i32, %arg1: i32, %arg2: i32) -> (i32, i32) {
    %c0_i32 = arith.constant 0 : i32
    return %arg0, %arg1 : i32, i32
  }
}

</mosaic_0001>

<llo_original>
// kernel: transformer_model.11
$region0: #{transformer_model.11}
  #allocation0 [shape = 'u32[]', space=smem, size = 0x4, offset = 0x4, fixed_abs, tag = 'smem constant byte address 0x4 - core index']
  #allocation1 [shape = 'u32[72,128]{1,0:T(1,128)}', space=vmem, size = 0x9000, scoped, tag = 'internal scratch']
  %s0 = inlined_call_operand.vmem [shape: bf16[3,2,4,8,8], index: 0, kind: input, shape index: {}, may-alias: {0,1,2}]
  %s1 = inlined_call_operand.vmem [shape: bf16[3,2,4,8,8], index: 1, kind: input, shape index: {}, may-alias: {0,1,2}]
  %s2 = inlined_call_operand.vmem [shape: bf16[3,2,4,8,8], index: 2, kind: input, shape index: {}, may-alias: {0,1,2}]
  %s3 = inlined_call_operand.vmem [shape: f32[2,1,8], index: 3, kind: input, shape index: {}]
  %s4 = inlined_call_operand.vmem [shape: bf16[2,4,8,8], index: 4, kind: output, shape index: {}]
  %s5 = sld [smem:[#allocation0]]
  $region49: #{transformer_model.11} parent=0
    _
  %s7 = ssub.s32 1, %s5
  %s8 = scalar_select 0, %s7, %s5
  loop: start=0, step=1, limit=10
  $region2: #{transformer_model.11} parent=0 // loop_pre_header
    _
  $region3: #{transformer_model.11} parent=0 // loop_header
    %s10 = sphi 0, %s14
    %p11 = scmp.ge.s32.totalorder %s10, 10
    %s17 = sphi 0, %s36
    %s18 = sphi 0, %s32
    %s19 = sphi 0, %s28
    %s20 = sphi 0, %s17
    %s21 = sphi 0, %s18
    %s22 = sphi 0, %s19
    %s23 = sphi 0, %s20
    %s24 = sphi 0, %s21
    %s25 = sphi 0, %s22
    %s43 = sphi 0, %s45
    %s46 = sphi 0, %s43
    %s47 = sphi 0, %s46
    %s63 = sphi 0, %s47
    %s71 = sphi 0, %s73
    %s74 = sphi 0, %s71
    %s75 = sphi 0, %s74
    %s91 = sphi 0, %s75
    %s99 = sphi 0, %s101
    %s102 = sphi 0, %s99
    %s103 = sphi 0, %s102
    %s119 = sphi 0, %s103
    %s125 = sphi 0, %s127
    %s128 = sphi 0, %s125
    %s129 = sphi 0, %s128
    %s145 = sphi 0, %s129
    %s155 = sphi 0, %s157
    %s158 = sphi 0, %s155
    %s159 = sphi 0, %s158
    %s175 = sphi 0, %s159
  $region4: #{transformer_model.11} parent=0 // loop_header_branch
    %13 = sbr.rel (%p11) target = $region8
  $region5: #{transformer_model.11} parent=0 // loop_body
    %s15 = ssub.s32 %s10, 1
    %s16 = ssub.s32 %s10, 2
    %s26 = sadd.s32 1, %s19
    %p27 = scmp.ge.s32.totalorder %s26, 1
    %s28 = scalar_select %p27, 0, %s26
    %s29 = sadd.s32 1, %s18
    %s30 = scalar_select %p27, %s29, %s18
    %p31 = scmp.ge.s32.totalorder %s30, 4
    %s32 = scalar_select %p31, 0, %s30
    %s33 = sadd.s32 1, %s17
    %s34 = scalar_select %p31, %s33, %s17
    %p35 = scmp.ge.s32.totalorder %s34, 2
    %s36 = scalar_select %p35, 0, %s34
    %s37 = ssub.s32 %s17, %s36
    %s38 = ssub.s32 %s18, %s32
    %s39 = sor.u32 %s37, %s38
    %s40 = ssub.s32 %s19, %s28
    %s41 = sor.u32 %s39, %s40
    %p42 = scmp.eq.s32.totalorder %s41, 0
    %s44 = sadd.s32 %s43, 1
    %s45 = scalar_select %p42, %s43, %s44
    %p48 = pneg %p42
    %p49 = scmp.eq.s32.totalorder %s10, 7
    %p50 = por %p48, %p49
    %p51 = scmp.ne.s32.totalorder %s43, %s46
    %p52 = scmp.eq.s32.totalorder %s10, 0
    %p53 = por %p51, %p52
    %p54 = scmp.ne.s32.totalorder %s43, %s46
    %p55 = scmp.eq.s32.totalorder %s15, 7
    %p56 = por %p54, %p55
    %p57 = scmp.ne.s32.totalorder %s46, %s47
    %p58 = scmp.eq.s32.totalorder %s15, 0
    %p59 = por %p57, %p58
    %p60 = scmp.ne.s32.totalorder %s46, %s47
    %p61 = scmp.eq.s32.totalorder %s16, 7
    %p62 = por %p60, %p61
    %p64 = scmp.ne.s32.totalorder %s47, %s63
    %p65 = scmp.eq.s32.totalorder %s16, 0
    %p66 = por %p64, %p65
    %s67 = ssub.s32 %s17, %s36
    %s68 = ssub.s32 %s18, %s32
    %s69 = sor.u32 %s67, %s68
    %p70 = scmp.eq.s32.totalorder %s69, 0
    %s72 = sadd.s32 %s71, 1
    %s73 = scalar_select %p70, %s71, %s72
    %p76 = pneg %p70
    %p77 = scmp.eq.s32.totalorder %s10, 7
    %p78 = por %p76, %p77
    %p79 = scmp.ne.s32.totalorder %s71, %s74
    %p80 = scmp.eq.s32.totalorder %s10, 0
    %p81 = por %p79, %p80
    %p82 = scmp.ne.s32.totalorder %s71, %s74
    %p83 = scmp.eq.s32.totalorder %s15, 7
    %p84 = por %p82, %p83
    %p85 = scmp.ne.s32.totalorder %s74, %s75
    %p86 = scmp.eq.s32.totalorder %s15, 0
    %p87 = por %p85, %p86
    %p88 = scmp.ne.s32.totalorder %s74, %s75
    %p89 = scmp.eq.s32.totalorder %s16, 7
    %p90 = por %p88, %p89
    %p92 = scmp.ne.s32.totalorder %s75, %s91
    %p93 = scmp.eq.s32.totalorder %s16, 0
    %p94 = por %p92, %p93
    %s95 = ssub.s32 %s17, %s36
    %s96 = ssub.s32 %s18, %s32
    %s97 = sor.u32 %s95, %s96
    %p98 = scmp.eq.s32.totalorder %s97, 0
    %s100 = sadd.s32 %s99, 1
    %s101 = scalar_select %p98, %s99, %s100
    %p104 = pneg %p98
    %p105 = scmp.eq.s32.totalorder %s10, 7
    %p106 = por %p104, %p105
    %p107 = scmp.ne.s32.totalorder %s99, %s102
    %p108 = scmp.eq.s32.totalorder %s10, 0
    %p109 = por %p107, %p108
    %p110 = scmp.ne.s32.totalorder %s99, %s102
    %p111 = scmp.eq.s32.totalorder %s15, 7
    %p112 = por %p110, %p111
    %p113 = scmp.ne.s32.totalorder %s102, %s103
    %p114 = scmp.eq.s32.totalorder %s15, 0
    %p115 = por %p113, %p114
    %p116 = scmp.ne.s32.totalorder %s102, %s103
    %p117 = scmp.eq.s32.totalorder %s16, 7
    %p118 = por %p116, %p117
    %p120 = scmp.ne.s32.totalorder %s103, %s119
    %p121 = scmp.eq.s32.totalorder %s16, 0
    %p122 = por %p120, %p121
    %s123 = ssub.s32 %s17, %s36
    %p124 = scmp.eq.s32.totalorder %s123, 0
    %s126 = sadd.s32 %s125, 1
    %s127 = scalar_select %p124, %s125, %s126
    %p130 = pneg %p124
    %p131 = scmp.eq.s32.totalorder %s10, 7
    %p132 = por %p130, %p131
    %p133 = scmp.ne.s32.totalorder %s125, %s128
    %p134 = scmp.eq.s32.totalorder %s10, 0
    %p135 = por %p133, %p134
    %p136 = scmp.ne.s32.totalorder %s125, %s128
    %p137 = scmp.eq.s32.totalorder %s15, 7
    %p138 = por %p136, %p137
    %p139 = scmp.ne.s32.totalorder %s128, %s129
    %p140 = scmp.eq.s32.totalorder %s15, 0
    %p141 = por %p139, %p140
    %p142 = scmp.ne.s32.totalorder %s128, %s129
    %p143 = scmp.eq.s32.totalorder %s16, 7
    %p144 = por %p142, %p143
    %p146 = scmp.ne.s32.totalorder %s129, %s145
    %p147 = scmp.eq.s32.totalorder %s16, 0
    %p148 = por %p146, %p147
    %s149 = ssub.s32 %s17, %s36
    %s150 = ssub.s32 %s18, %s32
    %s151 = sor.u32 %s149, %s150
    %s152 = ssub.s32 %s19, %s28
    %s153 = sor.u32 %s151, %s152
    %p154 = scmp.eq.s32.totalorder %s153, 0
    %s156 = sadd.s32 %s155, 1
    %s157 = scalar_select %p154, %s155, %s156
    %p160 = pneg %p154
    %p161 = scmp.eq.s32.totalorder %s10, 7
    %p162 = por %p160, %p161
    %p163 = scmp.ne.s32.totalorder %s155, %s158
    %p164 = scmp.eq.s32.totalorder %s10, 0
    %p165 = por %p163, %p164
    %p166 = scmp.ne.s32.totalorder %s155, %s158
    %p167 = scmp.eq.s32.totalorder %s15, 7
    %p168 = por %p166, %p167
    %p169 = scmp.ne.s32.totalorder %s158, %s159
    %p170 = scmp.eq.s32.totalorder %s15, 0
    %p171 = por %p169, %p170
    %p172 = scmp.ne.s32.totalorder %s158, %s159
    %p173 = scmp.eq.s32.totalorder %s16, 7
    %p174 = por %p172, %p173
    %p176 = scmp.ne.s32.totalorder %s159, %s175
    %p177 = scmp.eq.s32.totalorder %s16, 0
    %p178 = por %p176, %p177
    %p179 = scmp.le.s32.totalorder 1, %s10
    %p180 = scmp.lt.s32.totalorder %s10, 9
    %p181 = pnand %p179, %p180
    %p182 = pneg %p181
    // Predicated region
    $region9: #{transformer_model.11} parent=5 // pred_check
      _
    $region10: #{transformer_model.11} parent=5 // pred_check_branch
      %184 = sbr.rel (%p181) target = $region12
    $region11: #{transformer_model.11} parent=5 // pred_region
      %s185 = ssub.s32 %s10, 1
    $region12: #{transformer_model.11} parent=5 // pred_fallthru
      _
    %p186 = scmp.lt.s32.totalorder %s10, 8
    // Predicated region
    $region13: #{transformer_model.11} parent=5 // pred_check
      %p187 = pneg %p186
    $region14: #{transformer_model.11} parent=5 // pred_check_branch
      %189 = sbr.rel (%p187) target = $region16
    $region15: #{transformer_model.11} parent=5 // pred_region
      // Predicated region
      $region17: #{transformer_model.11} parent=15 // pred_check
        %p190 = pneg %p53
      $region18: #{transformer_model.11} parent=15 // pred_check_branch
        %192 = sbr.rel (%p190) target = $region20
      $region19: #{transformer_model.11} parent=15 // pred_region
        %p193 = scmp.lt.s32.totalorder %s17, 1
        %s194 = scalar_select %p193, %s17, 1
        %p195 = scmp.lt.s32.totalorder %s18, 3
        %s196 = scalar_select %p195, %s18, 3
        %p197 = scmp.lt.s32.totalorder %s19, 0
        %s198 = scalar_select %p197, %s19, 0
        %s199 = sadd.s32 %s198, %s196
        %s200 = smul.addr %s194, 4
        %s201 = sadd.s32 %s199, %s200
        %s202 = smul.addr %s201, 4
        %s203 = scalar_lea.vmem %s0, %s202
      $region20: #{transformer_model.11} parent=15 // pred_fallthru
        _
      // Predicated region
      $region21: #{transformer_model.11} parent=15 // pred_check
        %p204 = pneg %p81
      $region22: #{transformer_model.11} parent=15 // pred_check_branch
        %206 = sbr.rel (%p204) target = $region24
      $region23: #{transformer_model.11} parent=15 // pred_region
        %p207 = scmp.lt.s32.totalorder %s17, 1
        %s208 = scalar_select %p207, %s17, 1
        %p209 = scmp.lt.s32.totalorder %s18, 3
        %s210 = scalar_select %p209, %s18, 3
        %s211 = smul.addr %s208, 4
        %s212 = sadd.s32 %s210, %s211
        %s213 = sadd.s32 %s212, 8
        %s214 = smul.addr %s213, 4
        %s215 = scalar_lea.vmem %s1, %s214
      $region24: #{transformer_model.11} parent=15 // pred_fallthru
        _
      // Predicated region
      $region25: #{transformer_model.11} parent=15 // pred_check
        %p216 = pneg %p109
      $region26: #{transformer_model.11} parent=15 // pred_check_branch
        %218 = sbr.rel (%p216) target = $region28
      $region27: #{transformer_model.11} parent=15 // pred_region
        %p219 = scmp.lt.s32.totalorder %s17, 1
        %s220 = scalar_select %p219, %s17, 1
        %p221 = scmp.lt.s32.totalorder %s18, 3
        %s222 = scalar_select %p221, %s18, 3
        %s223 = smul.addr %s220, 4
        %s224 = sadd.s32 %s222, %s223
        %s225 = sadd.s32 %s224, 16
        %s226 = smul.addr %s225, 4
        %s227 = scalar_lea.vmem %s2, %s226
      $region28: #{transformer_model.11} parent=15 // pred_fallthru
        _
      // Predicated region
      $region29: #{transformer_model.11} parent=15 // pred_check
        %p228 = pneg %p135
      $region30: #{transformer_model.11} parent=15 // pred_check_branch
        %230 = sbr.rel (%p228) target = $region32
      $region31: #{transformer_model.11} parent=15 // pred_region
        %p231 = scmp.lt.s32.totalorder %s17, 1
        %s232 = scalar_select %p231, %s17, 1
        %s233 = scalar_lea.vmem %s3, %s232
      $region32: #{transformer_model.11} parent=15 // pred_fallthru
        _
    $region16: #{transformer_model.11} parent=5 // pred_fallthru
      _
    %p234 = scmp.le.s32.totalorder 1, %s10
    %p235 = scmp.lt.s32.totalorder %s10, 9
    %p236 = pnand %p234, %p235
    %p237 = pneg %p236
    // Predicated region
    $region33: #{transformer_model.11} parent=5 // pred_check
      _
    $region34: #{transformer_model.11} parent=5 // pred_check_branch
      %239 = sbr.rel (%p236) target = $region36
    $region35: #{transformer_model.11} parent=5 // pred_region
      %s240 = ssub.s32 %s10, 1
      %p241 = scmp.lt.s32.totalorder %s20, 1
      %s242 = scalar_select %p241, %s20, 1
      %p243 = scmp.lt.s32.totalorder %s21, 3
      %s244 = scalar_select %p243, %s21, 3
      %p245 = scmp.lt.s32.totalorder %s22, 0
      %s246 = scalar_select %p245, %s22, 0
      %s247 = sadd.s32 %s246, %s244
      %s248 = smul.addr %s242, 4
      %s249 = sadd.s32 %s247, %s248
      %s250 = smul.addr %s249, 4
      %s251 = scalar_lea.vmem %s0, %s250
      %p252 = pneg %p59
      %p253 = pneg %p56
      %p254 = scmp.lt.s32.totalorder %s20, 1
      %s255 = scalar_select %p254, %s20, 1
      %p256 = scmp.lt.s32.totalorder %s21, 3
      %s257 = scalar_select %p256, %s21, 3
      %s258 = smul.addr %s255, 4
      %s259 = sadd.s32 %s257, %s258
      %s260 = sadd.s32 %s259, 8
      %s261 = smul.addr %s260, 4
      %s262 = scalar_lea.vmem %s1, %s261
      %p263 = pneg %p87
      %p264 = pneg %p84
      %p265 = scmp.lt.s32.totalorder %s20, 1
      %s266 = scalar_select %p265, %s20, 1
      %p267 = scmp.lt.s32.totalorder %s21, 3
      %s268 = scalar_select %p267, %s21, 3
      %s269 = smul.addr %s266, 4
      %s270 = sadd.s32 %s268, %s269
      %s271 = sadd.s32 %s270, 16
      %s272 = smul.addr %s271, 4
      %s273 = scalar_lea.vmem %s2, %s272
      %p274 = pneg %p115
      %p275 = pneg %p112
      %p276 = scmp.lt.s32.totalorder %s20, 1
      %s277 = scalar_select %p276, %s20, 1
      %s278 = scalar_lea.vmem %s3, %s277
      %p279 = pneg %p141
      %p280 = pneg %p138
      %p281 = pneg %p171
      %p282 = pneg %p168
      %p283 = scmp.lt.s32.totalorder %s20, 1
      %s284 = scalar_select %p283, %s20, 1
      %p285 = scmp.lt.s32.totalorder %s21, 3
      %s286 = scalar_select %p285, %s21, 3
      %p287 = scmp.lt.s32.totalorder %s22, 0
      %s288 = scalar_select %p287, %s22, 0
      %s289 = sadd.s32 %s288, %s286
      %s290 = smul.addr %s284, 4
      %s291 = sadd.s32 %s289, %s290
      %s292 = smul.addr %s291, 4
      %s293 = scalar_lea.vmem %s4, %s292
      %p294 = scmp.lt.s32.totalorder %s20, 1
      %s295 = scalar_select %p294, %s20, 1
      %p296 = scmp.lt.s32.totalorder %s21, 3
      %s297 = scalar_select %p296, %s21, 3
      %p298 = scmp.lt.s32.totalorder %s22, 0
      %s299 = scalar_select %p298, %s22, 0
      %s300 = sadd.s32 %s299, %s297
      %s301 = smul.addr %s295, 4
      %s302 = sadd.s32 %s300, %s301
      %s303 = smul.addr %s302, 4
      %s304 = scalar_lea.vmem %s0, %s303
      %p305 = scmp.lt.s32.totalorder %s20, 1
      %s306 = scalar_select %p305, %s20, 1
      %p307 = scmp.lt.s32.totalorder %s21, 3
      %s308 = scalar_select %p307, %s21, 3
      %s309 = smul.addr %s306, 4
      %s310 = sadd.s32 %s308, %s309
      %s311 = sadd.s32 %s310, 8
      %s312 = smul.addr %s311, 4
      %s313 = scalar_lea.vmem %s1, %s312
      %p314 = scmp.lt.s32.totalorder %s20, 1
      %s315 = scalar_select %p314, %s20, 1
      %p316 = scmp.lt.s32.totalorder %s21, 3
      %s317 = scalar_select %p316, %s21, 3
      %s318 = smul.addr %s315, 4
      %s319 = sadd.s32 %s317, %s318
      %s320 = sadd.s32 %s319, 16
      %s321 = smul.addr %s320, 4
      %s322 = scalar_lea.vmem %s2, %s321
      %p323 = scmp.lt.s32.totalorder %s20, 1
      %s324 = scalar_select %p323, %s20, 1
      %s325 = scalar_lea.vmem %s3, %s324
      %p326 = scmp.lt.s32.totalorder %s20, 1
      %s327 = scalar_select %p326, %s20, 1
      %p328 = scmp.lt.s32.totalorder %s21, 3
      %s329 = scalar_select %p328, %s21, 3
      %p330 = scmp.lt.s32.totalorder %s22, 0
      %s331 = scalar_select %p330, %s22, 0
      %s332 = sadd.s32 %s331, %s329
      %s333 = smul.addr %s327, 4
      %s334 = sadd.s32 %s332, %s333
      %s335 = smul.addr %s334, 4
      %s336 = scalar_lea.vmem %s4, %s335
      %v338 = vld [vmem:[%s304] sm:$0xf]
      %v339 = vld [vmem:[%s313] sm:$0xf]
      %v340 = vld [vmem:[%s322] sm:$0xf]
      %vm341 = vcmask 64512
      %v343 = vsel %vm341, %v338, 0
      %v346 = vsel %vm341, %v339, 0
      %348 = vmatpush.bf16.xpose.msra.mxu0 0
      %349 = vmatpush.bf16.xpose.msra.mxu0 0
      %350 = vmatpush.bf16.xpose.msra.mxu0 0
      %351 = vmatpush.bf16.xpose.msra.mxu0 0
      %352 = vmatpush.bf16.xpose.msra.mxu0 0
      %353 = vmatpush.bf16.xpose.msra.mxu0 0
      %354 = vmatpush.bf16.xpose.msra.mxu0 0
      %355 = vmatpush.bf16.xpose.msra.mxu0 %v346
      %356 = vmatmul.bf16.gmra.mxu0 %v343
      %v357 = vpop.f32.mrf.mxu0
      %v358 = vadd.f32 0.0, %v357
      %v359 = vpop.f32.mrf.mxu0
      %360 = vdwg.mxu0
      %v361 = vmul.f32 %v358, 0.35355338
      %v362 = vld [vmem:[%s325] sm:$0x1]
      %v364 = vperm.slane %v362, 0
      %v366 = vadd.f32 %v361, %v364
      %v367 = vsel %vm341, %v366, -inf
      %368 = vmax.xlane.f32.xlu0 %v367
      %v369 = vpop.xlane.xlu0 %368
      %v370 = vsub.f32 %v366, %v369
      %v371 = vmul.f32 %v370, 1.442695
      %v372 = vpow.pop %v371
      %v373 = vsel %vm341, %v372, 0.0
      %374 = vadd.xlane.f32.xlu0 %v373
      %v375 = vpop.xlane.xlu0 %374
      %v376 = vrcp.pop %v375
      %v377 = vmul.f32 %v372, %v376
      %v378 = vpack.c.bf16 %v377, %v377
      %v380 = vsel %vm341, %v378, 0
      %vm382 = vcmask 1043456
      %v384 = vsel %vm382, %v340, 0
      %386 = vmatpush.bf16.msra.mxu0 0
      %387 = vmatpush.bf16.msra.mxu0 0
      %388 = vmatpush.bf16.msra.mxu0 0
      %389 = vmatpush.bf16.msra.mxu0 0
      %390 = vmatpush.bf16.msra.mxu0 0
      %391 = vmatpush.bf16.msra.mxu0 0
      %392 = vmatpush.bf16.msra.mxu0 0
      %393 = vmatpush.bf16.msra.mxu0 %v384
      %394 = vmatmul.bf16.gmra.mxu0 %v380
      %v395 = vpop.f32.mrf.mxu0
      %v396 = vadd.f32 0.0, %v395
      %v397 = vpop.f32.mrf.mxu0
      %398 = vdwg.mxu0
      %v399 = vpack.c.bf16 %v396, %v396
      %vm400 = vcmask 60416
      %401 = vst.msk [vmem:[%s336] sm:$0xf] %vm400, %v399
      %p402 = scmp.lt.s32.totalorder %s20, 1
      %s403 = scalar_select %p402, %s20, 1
      %p404 = scmp.lt.s32.totalorder %s21, 3
      %s405 = scalar_select %p404, %s21, 3
      %p406 = scmp.lt.s32.totalorder %s22, 0
      %s407 = scalar_select %p406, %s22, 0
      %s408 = sadd.s32 %s407, %s405
      %s409 = smul.addr %s403, 4
      %s410 = sadd.s32 %s408, %s409
      %s411 = smul.addr %s410, 4
      %s412 = scalar_lea.vmem %s4, %s411
      // Predicated region
      $region37: #{transformer_model.11} parent=35 // pred_check
        %p413 = pneg %p168
      $region38: #{transformer_model.11} parent=35 // pred_check_branch
        %415 = sbr.rel (%p413) target = $region40
      $region39: #{transformer_model.11} parent=35 // pred_region
        _
      $region40: #{transformer_model.11} parent=35 // pred_fallthru
        _
    $region36: #{transformer_model.11} parent=5 // pred_fallthru
      _
    %p416 = scmp.le.s32.totalorder 2, %s10
    // Predicated region
    $region41: #{transformer_model.11} parent=5 // pred_check
      %p417 = pneg %p416
    $region42: #{transformer_model.11} parent=5 // pred_check_branch
      %419 = sbr.rel (%p417) target = $region44
    $region43: #{transformer_model.11} parent=5 // pred_region
      %s420 = ssub.s32 %s10, 2
      // Predicated region
      $region45: #{transformer_model.11} parent=43 // pred_check
        %p421 = pneg %p174
      $region46: #{transformer_model.11} parent=43 // pred_check_branch
        %423 = sbr.rel (%p421) target = $region48
      $region47: #{transformer_model.11} parent=43 // pred_region
        %p424 = scmp.lt.s32.totalorder %s23, 1
        %s425 = scalar_select %p424, %s23, 1
        %p426 = scmp.lt.s32.totalorder %s24, 3
        %s427 = scalar_select %p426, %s24, 3
        %p428 = scmp.lt.s32.totalorder %s25, 0
        %s429 = scalar_select %p428, %s25, 0
        %s430 = sadd.s32 %s429, %s427
        %s431 = smul.addr %s425, 4
        %s432 = sadd.s32 %s430, %s431
        %s433 = smul.addr %s432, 4
        %s434 = scalar_lea.vmem %s4, %s433
      $region48: #{transformer_model.11} parent=43 // pred_fallthru
        _
    $region44: #{transformer_model.11} parent=5 // pred_fallthru
      _
  $region6: #{transformer_model.11} parent=0 // loop_footer
    %s14 = sadd.s32 1, %s10
  $region7: #{transformer_model.11} parent=0 // loop_footer_branch
    %9 = sbr.rel target = $region3
  $region8: #{transformer_model.11} parent=0 // loop_exit
    _

// kernel: transformer_model.10
$region0: #{transformer_model.10}
  #allocation0 [shape = 'u32[]', space=smem, size = 0x4, offset = 0x4, fixed_abs, tag = 'smem constant byte address 0x4 - core index']
  #allocation1 [shape = 'u32[72,128]{1,0:T(1,128)}', space=vmem, size = 0x9000, scoped, tag = 'internal scratch']
  #allocation2 [shape = 'f32[16,96]{1,0:T(8,128)}', space=vmem, size = 0x2000, scoped, tag = 'scratch operand']
  %s0 = inlined_call_operand.vmem [shape: f32[16,32], index: 0, kind: input, shape index: {}]
  %s1 = inlined_call_operand.vmem [shape: bf16[32,96], index: 1, kind: input, shape index: {}]
  %s2 = inlined_call_operand.vmem [shape: f32[1,96], index: 2, kind: input, shape index: {}]
  %s3 = inlined_call_operand.vmem [shape: bf16[16,96], index: 3, kind: output, shape index: {}]
  %s4 = sld [smem:[#allocation0]]
  $region30: #{transformer_model.10} parent=0
    _
  %s6 = ssub.s32 1, %s4
  %s7 = scalar_select 0, %s6, %s4
  // Predicated region
  $region2: #{transformer_model.10} parent=0 // pred_check
    _
  $region3: #{transformer_model.10} parent=0 // pred_check_branch
    %9 = sbr.rel (0) target = $region5
  $region4: #{transformer_model.10} parent=0 // pred_region
    _
  $region5: #{transformer_model.10} parent=0 // pred_fallthru
    _
  // Predicated region
  $region6: #{transformer_model.10} parent=0 // pred_check
    _
  $region7: #{transformer_model.10} parent=0 // pred_check_branch
    %11 = sbr.rel (0) target = $region9
  $region8: #{transformer_model.10} parent=0 // pred_region
    _
  $region9: #{transformer_model.10} parent=0 // pred_fallthru
    _
  // Predicated region
  $region10: #{transformer_model.10} parent=0 // pred_check
    _
  $region11: #{transformer_model.10} parent=0 // pred_check_branch
    %13 = sbr.rel (0) target = $region13
  $region12: #{transformer_model.10} parent=0 // pred_region
    _
  $region13: #{transformer_model.10} parent=0 // pred_fallthru
    _
  %p15 = scmp.eq.s32.totalorder 0, 0
  // Predicated region
  $region14: #{transformer_model.10} parent=0 // pred_check
    %p16 = pneg %p15
  $region15: #{transformer_model.10} parent=0 // pred_check_branch
    %18 = sbr.rel (%p16) target = $region17
  $region16: #{transformer_model.10} parent=0 // pred_region
    %vm19 = vcmask 785408
    %20 = vst.msk [vmem:[#allocation2] sm:$0xff] %vm19, 0.0
    %21 = vst.msk [vmem:[#allocation2 + $0x8] sm:$0xff] %vm19, 0.0
  $region17: #{transformer_model.10} parent=0 // pred_fallthru
    _
  %v22 = vld [vmem:[%s0] sm:$0xff]
  %v23 = vld [vmem:[%s0 + $0x8] sm:$0xff]
  %v24 = vld [vmem:[#allocation2] sm:$0xff]
  %v25 = vld [vmem:[#allocation2 + $0x8] sm:$0xff]
  %v26 = vpack.c.bf16 %v23, %v22
  %v27 = vld [vmem:[%s1] sm:$0xf]
  %v28 = vld [vmem:[%s1 + $0x4] sm:$0xf]
  %v29 = vld [vmem:[%s1 + $0x8] sm:$0xf]
  %v30 = vld [vmem:[%s1 + $0xc] sm:$0xf]
  %v35 = vunpack.c.l.b16 %v27
  %v36 = vunpack.c.l.b16 %v28
  %v37 = vunpack.c.l.b16 %v29
  %v38 = vunpack.c.l.b16 %v30
  %v39 = vpack.c.b16 %v36, %v35
  %v40 = vpack.c.b16 %v38, %v37
  %vm43 = vcmask 261120
  %v45 = vsel %vm43, %v26, 0
  %47 = vmatpush.bf16.msra.mxu0 0
  %48 = vmatpush.bf16.msra.mxu0 0
  %49 = vmatpush.bf16.msra.mxu0 0
  %50 = vmatpush.bf16.msra.mxu0 0
  %51 = vmatpush.bf16.msra.mxu0 0
  %52 = vmatpush.bf16.msra.mxu0 0
  %53 = vmatpush.bf16.msra.mxu0 %v40
  %54 = vmatpush.bf16.msra.mxu0 %v39
  %55 = vmatmul.bf16.gmra.mxu0 %v45
  %v56 = vpop.f32.mrf.mxu0
  %v57 = vadd.f32 0.0, %v56
  %v58 = vpop.f32.mrf.mxu0
  %v59 = vadd.f32 0.0, %v58
  %60 = vdwg.mxu0
  %v61 = vadd.f32 %v24, %v57
  %v62 = vadd.f32 %v25, %v59
  %vm63 = vcmask 785408
  %64 = vst.msk [vmem:[#allocation2] sm:$0xff] %vm63, %v61
  %65 = vst.msk [vmem:[#allocation2 + $0x8] sm:$0xff] %vm63, %v62
  // Predicated region
  $region18: #{transformer_model.10} parent=0 // pred_check
    %p66 = pneg %p15
  $region19: #{transformer_model.10} parent=0 // pred_check_branch
    %68 = sbr.rel (%p66) target = $region21
  $region20: #{transformer_model.10} parent=0 // pred_region
    %v69 = vld [vmem:[#allocation2] sm:$0xff]
    %v70 = vld [vmem:[#allocation2 + $0x8] sm:$0xff]
    %v71 = vld [vmem:[%s2] sm:$0x1]
    %v73 = vperm.slane %v71, 0
    %v75 = vadd.f32 %v69, %v73
    %v76 = vadd.f32 %v70, %v73
    %v77 = vpack.c.bf16 %v75, %v75
    %v78 = vpack.c.bf16 %v76, %v76
    %vm79 = vcmask 781312
    %80 = vst.msk [vmem:[%s3] sm:$0xf] %vm79, %v77
    %81 = vst.msk [vmem:[%s3 + $0x4] sm:$0xf] %vm79, %v78
  $region21: #{transformer_model.10} parent=0 // pred_fallthru
    _
  // Predicated region
  $region22: #{transformer_model.10} parent=0 // pred_check
    _
  $region23: #{transformer_model.10} parent=0 // pred_check_branch
    %83 = sbr.rel (0) target = $region25
  $region24: #{transformer_model.10} parent=0 // pred_region
    _
  $region25: #{transformer_model.10} parent=0 // pred_fallthru
    _
  // Predicated region
  $region26: #{transformer_model.10} parent=0 // pred_check
    _
  $region27: #{transformer_model.10} parent=0 // pred_check_branch
    %85 = sbr.rel (0) target = $region29
  $region28: #{transformer_model.10} parent=0 // pred_region
    _
  $region29: #{transformer_model.10} parent=0 // pred_fallthru
    _

// kernel: transformer_model.12
$region0: #{transformer_model.12}
  #allocation0 [shape = 'u32[]', space=smem, size = 0x4, offset = 0x4, fixed_abs, tag = 'smem constant byte address 0x4 - core index']
  #allocation1 [shape = 'u32[72,128]{1,0:T(1,128)}', space=vmem, size = 0x9000, scoped, tag = 'internal scratch']
  %s0 = inlined_call_operand.vmem [shape: bf16[2,4,8,8], index: 0, kind: input, shape index: {}]
  %s1 = inlined_call_operand.vmem [shape: bf16[4,8,32], index: 1, kind: input, shape index: {}]
  %s2 = inlined_call_operand.vmem [shape: f32[1,32], index: 2, kind: input, shape index: {}]
  %s3 = inlined_call_operand.vmem [shape: f32[2,8,32], index: 3, kind: input, shape index: {}]
  %s4 = inlined_call_operand.vmem [shape: f32[1,32], index: 4, kind: input, shape index: {}]
  %s5 = inlined_call_operand.vmem [shape: f32[1,32], index: 5, kind: input, shape index: {}]
  %s6 = inlined_call_operand.vmem [shape: f32[2,8,32], index: 6, kind: output, shape index: {}]
  %s7 = sld [smem:[#allocation0]]
  $region57: #{transformer_model.12} parent=0
    _
  %s9 = ssub.s32 1, %s7
  %s10 = scalar_select 0, %s9, %s7
  loop: start=0, step=1, limit=4
  $region2: #{transformer_model.12} parent=0 // loop_pre_header
    _
  $region3: #{transformer_model.12} parent=0 // loop_header
    %s12 = sphi 0, %s16
    %p13 = scmp.ge.s32.totalorder %s12, 4
    %s19 = sphi 0, %s31
    %s20 = sphi 0, %s27
    %s21 = sphi 0, %s19
    %s22 = sphi 0, %s20
    %s23 = sphi 0, %s21
    %s24 = sphi 0, %s22
    %s36 = sphi 0, %s38
    %s39 = sphi 0, %s36
    %s40 = sphi 0, %s39
    %s56 = sphi 0, %s40
    %s60 = sphi 0, %s60
    %s62 = sphi 0, %s60
    %s63 = sphi 0, %s62
    %s77 = sphi 0, %s63
    %s81 = sphi 0, %s81
    %s83 = sphi 0, %s81
    %s84 = sphi 0, %s83
    %s98 = sphi 0, %s84
    %s106 = sphi 0, %s108
    %s109 = sphi 0, %s106
    %s110 = sphi 0, %s109
    %s126 = sphi 0, %s110
    %s130 = sphi 0, %s130
    %s132 = sphi 0, %s130
    %s133 = sphi 0, %s132
    %s147 = sphi 0, %s133
    %s151 = sphi 0, %s151
    %s153 = sphi 0, %s151
    %s154 = sphi 0, %s153
    %s168 = sphi 0, %s154
    %s176 = sphi 0, %s178
    %s179 = sphi 0, %s176
    %s180 = sphi 0, %s179
    %s196 = sphi 0, %s180
  $region4: #{transformer_model.12} parent=0 // loop_header_branch
    %15 = sbr.rel (%p13) target = $region8
  $region5: #{transformer_model.12} parent=0 // loop_body
    %s17 = ssub.s32 %s12, 1
    %s18 = ssub.s32 %s12, 2
    %s25 = sadd.s32 1, %s20
    %p26 = scmp.ge.s32.totalorder %s25, 1
    %s27 = scalar_select %p26, 0, %s25
    %s28 = sadd.s32 1, %s19
    %s29 = scalar_select %p26, %s28, %s19
    %p30 = scmp.ge.s32.totalorder %s29, 2
    %s31 = scalar_select %p30, 0, %s29
    %s32 = ssub.s32 %s19, %s31
    %s33 = ssub.s32 %s20, %s27
    %s34 = sor.u32 %s32, %s33
    %p35 = scmp.eq.s32.totalorder %s34, 0
    %s37 = sadd.s32 %s36, 1
    %s38 = scalar_select %p35, %s36, %s37
    %p41 = pneg %p35
    %p42 = scmp.eq.s32.totalorder %s12, 1
    %p43 = por %p41, %p42
    %p44 = scmp.ne.s32.totalorder %s36, %s39
    %p45 = scmp.eq.s32.totalorder %s12, 0
    %p46 = por %p44, %p45
    %p47 = scmp.ne.s32.totalorder %s36, %s39
    %p48 = scmp.eq.s32.totalorder %s17, 1
    %p49 = por %p47, %p48
    %p50 = scmp.ne.s32.totalorder %s39, %s40
    %p51 = scmp.eq.s32.totalorder %s17, 0
    %p52 = por %p50, %p51
    %p53 = scmp.ne.s32.totalorder %s39, %s40
    %p54 = scmp.eq.s32.totalorder %s18, 1
    %p55 = por %p53, %p54
    %p57 = scmp.ne.s32.totalorder %s40, %s56
    %p58 = scmp.eq.s32.totalorder %s18, 0
    %p59 = por %p57, %p58
    %s61 = sadd.s32 %s60, 1
    %p64 = scmp.eq.s32.totalorder %s12, 1
    %p65 = scmp.ne.s32.totalorder %s60, %s62
    %p66 = scmp.eq.s32.totalorder %s12, 0
    %p67 = por %p65, %p66
    %p68 = scmp.ne.s32.totalorder %s60, %s62
    %p69 = scmp.eq.s32.totalorder %s17, 1
    %p70 = por %p68, %p69
    %p71 = scmp.ne.s32.totalorder %s62, %s63
    %p72 = scmp.eq.s32.totalorder %s17, 0
    %p73 = por %p71, %p72
    %p74 = scmp.ne.s32.totalorder %s62, %s63
    %p75 = scmp.eq.s32.totalorder %s18, 1
    %p76 = por %p74, %p75
    %p78 = scmp.ne.s32.totalorder %s63, %s77
    %p79 = scmp.eq.s32.totalorder %s18, 0
    %p80 = por %p78, %p79
    %s82 = sadd.s32 %s81, 1
    %p85 = scmp.eq.s32.totalorder %s12, 1
    %p86 = scmp.ne.s32.totalorder %s81, %s83
    %p87 = scmp.eq.s32.totalorder %s12, 0
    %p88 = por %p86, %p87
    %p89 = scmp.ne.s32.totalorder %s81, %s83
    %p90 = scmp.eq.s32.totalorder %s17, 1
    %p91 = por %p89, %p90
    %p92 = scmp.ne.s32.totalorder %s83, %s84
    %p93 = scmp.eq.s32.totalorder %s17, 0
    %p94 = por %p92, %p93
    %p95 = scmp.ne.s32.totalorder %s83, %s84
    %p96 = scmp.eq.s32.totalorder %s18, 1
    %p97 = por %p95, %p96
    %p99 = scmp.ne.s32.totalorder %s84, %s98
    %p100 = scmp.eq.s32.totalorder %s18, 0
    %p101 = por %p99, %p100
    %s102 = ssub.s32 %s19, %s31
    %s103 = ssub.s32 %s20, %s27
    %s104 = sor.u32 %s102, %s103
    %p105 = scmp.eq.s32.totalorder %s104, 0
    %s107 = sadd.s32 %s106, 1
    %s108 = scalar_select %p105, %s106, %s107
    %p111 = pneg %p105
    %p112 = scmp.eq.s32.totalorder %s12, 1
    %p113 = por %p111, %p112
    %p114 = scmp.ne.s32.totalorder %s106, %s109
    %p115 = scmp.eq.s32.totalorder %s12, 0
    %p116 = por %p114, %p115
    %p117 = scmp.ne.s32.totalorder %s106, %s109
    %p118 = scmp.eq.s32.totalorder %s17, 1
    %p119 = por %p117, %p118
    %p120 = scmp.ne.s32.totalorder %s109, %s110
    %p121 = scmp.eq.s32.totalorder %s17, 0
    %p122 = por %p120, %p121
    %p123 = scmp.ne.s32.totalorder %s109, %s110
    %p124 = scmp.eq.s32.totalorder %s18, 1
    %p125 = por %p123, %p124
    %p127 = scmp.ne.s32.totalorder %s110, %s126
    %p128 = scmp.eq.s32.totalorder %s18, 0
    %p129 = por %p127, %p128
    %s131 = sadd.s32 %s130, 1
    %p134 = scmp.eq.s32.totalorder %s12, 1
    %p135 = scmp.ne.s32.totalorder %s130, %s132
    %p136 = scmp.eq.s32.totalorder %s12, 0
    %p137 = por %p135, %p136
    %p138 = scmp.ne.s32.totalorder %s130, %s132
    %p139 = scmp.eq.s32.totalorder %s17, 1
    %p140 = por %p138, %p139
    %p141 = scmp.ne.s32.totalorder %s132, %s133
    %p142 = scmp.eq.s32.totalorder %s17, 0
    %p143 = por %p141, %p142
    %p144 = scmp.ne.s32.totalorder %s132, %s133
    %p145 = scmp.eq.s32.totalorder %s18, 1
    %p146 = por %p144, %p145
    %p148 = scmp.ne.s32.totalorder %s133, %s147
    %p149 = scmp.eq.s32.totalorder %s18, 0
    %p150 = por %p148, %p149
    %s152 = sadd.s32 %s151, 1
    %p155 = scmp.eq.s32.totalorder %s12, 1
    %p156 = scmp.ne.s32.totalorder %s151, %s153
    %p157 = scmp.eq.s32.totalorder %s12, 0
    %p158 = por %p156, %p157
    %p159 = scmp.ne.s32.totalorder %s151, %s153
    %p160 = scmp.eq.s32.totalorder %s17, 1
    %p161 = por %p159, %p160
    %p162 = scmp.ne.s32.totalorder %s153, %s154
    %p163 = scmp.eq.s32.totalorder %s17, 0
    %p164 = por %p162, %p163
    %p165 = scmp.ne.s32.totalorder %s153, %s154
    %p166 = scmp.eq.s32.totalorder %s18, 1
    %p167 = por %p165, %p166
    %p169 = scmp.ne.s32.totalorder %s154, %s168
    %p170 = scmp.eq.s32.totalorder %s18, 0
    %p171 = por %p169, %p170
    %s172 = ssub.s32 %s19, %s31
    %s173 = ssub.s32 %s20, %s27
    %s174 = sor.u32 %s172, %s173
    %p175 = scmp.eq.s32.totalorder %s174, 0
    %s177 = sadd.s32 %s176, 1
    %s178 = scalar_select %p175, %s176, %s177
    %p181 = pneg %p175
    %p182 = scmp.eq.s32.totalorder %s12, 1
    %p183 = por %p181, %p182
    %p184 = scmp.ne.s32.totalorder %s176, %s179
    %p185 = scmp.eq.s32.totalorder %s12, 0
    %p186 = por %p184, %p185
    %p187 = scmp.ne.s32.totalorder %s176, %s179
    %p188 = scmp.eq.s32.totalorder %s17, 1
    %p189 = por %p187, %p188
    %p190 = scmp.ne.s32.totalorder %s179, %s180
    %p191 = scmp.eq.s32.totalorder %s17, 0
    %p192 = por %p190, %p191
    %p193 = scmp.ne.s32.totalorder %s179, %s180
    %p194 = scmp.eq.s32.totalorder %s18, 1
    %p195 = por %p193, %p194
    %p197 = scmp.ne.s32.totalorder %s180, %s196
    %p198 = scmp.eq.s32.totalorder %s18, 0
    %p199 = por %p197, %p198
    %p200 = scmp.le.s32.totalorder 1, %s12
    %p201 = scmp.lt.s32.totalorder %s12, 3
    %p202 = pnand %p200, %p201
    %p203 = pneg %p202
    // Predicated region
    $region9: #{transformer_model.12} parent=5 // pred_check
      _
    $region10: #{transformer_model.12} parent=5 // pred_check_branch
      %205 = sbr.rel (%p202) target = $region12
    $region11: #{transformer_model.12} parent=5 // pred_region
      %s206 = ssub.s32 %s12, 1
      // Predicated region
      $region13: #{transformer_model.12} parent=11 // pred_check
        %p207 = pneg %p73
      $region14: #{transformer_model.12} parent=11 // pred_check_branch
        %209 = sbr.rel (%p207) target = $region16
      $region15: #{transformer_model.12} parent=11 // pred_region
        _
      $region16: #{transformer_model.12} parent=11 // pred_fallthru
        _
      // Predicated region
      $region17: #{transformer_model.12} parent=11 // pred_check
        %p210 = pneg %p94
      $region18: #{transformer_model.12} parent=11 // pred_check_branch
        %212 = sbr.rel (%p210) target = $region20
      $region19: #{transformer_model.12} parent=11 // pred_region
        _
      $region20: #{transformer_model.12} parent=11 // pred_fallthru
        _
      // Predicated region
      $region21: #{transformer_model.12} parent=11 // pred_check
        %p213 = pneg %p143
      $region22: #{transformer_model.12} parent=11 // pred_check_branch
        %215 = sbr.rel (%p213) target = $region24
      $region23: #{transformer_model.12} parent=11 // pred_region
        _
      $region24: #{transformer_model.12} parent=11 // pred_fallthru
        _
      // Predicated region
      $region25: #{transformer_model.12} parent=11 // pred_check
        %p216 = pneg %p164
      $region26: #{transformer_model.12} parent=11 // pred_check_branch
        %218 = sbr.rel (%p216) target = $region28
      $region27: #{transformer_model.12} parent=11 // pred_region
        _
      $region28: #{transformer_model.12} parent=11 // pred_fallthru
        _
    $region12: #{transformer_model.12} parent=5 // pred_fallthru
      _
    %p219 = scmp.lt.s32.totalorder %s12, 2
    // Predicated region
    $region29: #{transformer_model.12} parent=5 // pred_check
      %p220 = pneg %p219
    $region30: #{transformer_model.12} parent=5 // pred_check_branch
      %222 = sbr.rel (%p220) target = $region32
    $region31: #{transformer_model.12} parent=5 // pred_region
      // Predicated region
      $region33: #{transformer_model.12} parent=31 // pred_check
        %p223 = pneg %p46
      $region34: #{transformer_model.12} parent=31 // pred_check_branch
        %225 = sbr.rel (%p223) target = $region36
      $region35: #{transformer_model.12} parent=31 // pred_region
        %p226 = scmp.lt.s32.totalorder %s19, 1
        %s227 = scalar_select %p226, %s19, 1
        %p228 = scmp.lt.s32.totalorder %s20, 0
        %s229 = scalar_select %p228, %s20, 0
        %s230 = smul.addr %s227, 4
        %s231 = sadd.s32 %s229, %s230
        %s232 = smul.addr %s231, 4
        %s233 = scalar_lea.vmem %s0, %s232
      $region36: #{transformer_model.12} parent=31 // pred_fallthru
        _
      // Predicated region
      $region37: #{transformer_model.12} parent=31 // pred_check
        %p234 = pneg %p116
      $region38: #{transformer_model.12} parent=31 // pred_check_branch
        %236 = sbr.rel (%p234) target = $region40
      $region39: #{transformer_model.12} parent=31 // pred_region
        %p237 = scmp.lt.s32.totalorder %s19, 1
        %s238 = scalar_select %p237, %s19, 1
        %p239 = scmp.lt.s32.totalorder %s20, 0
        %s240 = scalar_select %p239, %s20, 0
        %s241 = sadd.s32 %s240, %s238
        %s242 = smul.addr %s241, 8
        %s243 = scalar_lea.vmem %s3, %s242
      $region40: #{transformer_model.12} parent=31 // pred_fallthru
        _
    $region32: #{transformer_model.12} parent=5 // pred_fallthru
      _
    %p244 = scmp.le.s32.totalorder 1, %s12
    %p245 = scmp.lt.s32.totalorder %s12, 3
    %p246 = pnand %p244, %p245
    %p247 = pneg %p246
    // Predicated region
    $region41: #{transformer_model.12} parent=5 // pred_check
      _
    $region42: #{transformer_model.12} parent=5 // pred_check_branch
      %249 = sbr.rel (%p246) target = $region44
    $region43: #{transformer_model.12} parent=5 // pred_region
      %s250 = ssub.s32 %s12, 1
      %p251 = scmp.lt.s32.totalorder %s21, 1
      %s252 = scalar_select %p251, %s21, 1
      %p253 = scmp.lt.s32.totalorder %s22, 0
      %s254 = scalar_select %p253, %s22, 0
      %s255 = smul.addr %s252, 4
      %s256 = sadd.s32 %s254, %s255
      %s257 = smul.addr %s256, 4
      %s258 = scalar_lea.vmem %s0, %s257
      %p259 = pneg %p52
      %p260 = pneg %p49
      %p261 = pneg %p73
      %p262 = pneg %p70
      %p263 = pneg %p94
      %p264 = pneg %p91
      %p265 = scmp.lt.s32.totalorder %s21, 1
      %s266 = scalar_select %p265, %s21, 1
      %p267 = scmp.lt.s32.totalorder %s22, 0
      %s268 = scalar_select %p267, %s22, 0
      %s269 = sadd.s32 %s268, %s266
      %s270 = smul.addr %s269, 8
      %s271 = scalar_lea.vmem %s3, %s270
      %p272 = pneg %p122
      %p273 = pneg %p119
      %p274 = pneg %p143
      %p275 = pneg %p140
      %p276 = pneg %p164
      %p277 = pneg %p161
      %p278 = pneg %p192
      %p279 = pneg %p189
      %p280 = scmp.lt.s32.totalorder %s21, 1
      %s281 = scalar_select %p280, %s21, 1
      %p282 = scmp.lt.s32.totalorder %s22, 0
      %s283 = scalar_select %p282, %s22, 0
      %s284 = sadd.s32 %s283, %s281
      %s285 = smul.addr %s284, 8
      %s286 = scalar_lea.vmem %s6, %s285
      %p287 = scmp.lt.s32.totalorder %s21, 1
      %s288 = scalar_select %p287, %s21, 1
      %p289 = scmp.lt.s32.totalorder %s22, 0
      %s290 = scalar_select %p289, %s22, 0
      %s291 = smul.addr %s288, 4
      %s292 = sadd.s32 %s290, %s291
      %s293 = smul.addr %s292, 4
      %s294 = scalar_lea.vmem %s0, %s293
      %p295 = scmp.lt.s32.totalorder %s21, 1
      %s296 = scalar_select %p295, %s21, 1
      %p297 = scmp.lt.s32.totalorder %s22, 0
      %s298 = scalar_select %p297, %s22, 0
      %s299 = sadd.s32 %s298, %s296
      %s300 = smul.addr %s299, 8
      %s301 = scalar_lea.vmem %s3, %s300
      %p302 = scmp.lt.s32.totalorder %s21, 1
      %s303 = scalar_select %p302, %s21, 1
      %p304 = scmp.lt.s32.totalorder %s22, 0
      %s305 = scalar_select %p304, %s22, 0
      %s306 = sadd.s32 %s305, %s303
      %s307 = smul.addr %s306, 8
      %s308 = scalar_lea.vmem %s6, %s307
      %v310 = vld [vmem:[%s294] sm:$0xf]
      %v311 = vld [vmem:[%s1] sm:$0xf]
      %s312 = scalar_lea.vmem %s294, 4
      %v313 = vld [vmem:[%s312] sm:$0xf]
      %s314 = scalar_lea.vmem %s1, 4
      %v315 = vld [vmem:[%s314] sm:$0xf]
      %vm316 = vcmask 64512
      %v318 = vsel %vm316, %v313, 0
      %vm320 = vcmask 1043456
      %v322 = vsel %vm320, %v315, 0
      %324 = vmatpush.bf16.msra.mxu0 0
      %325 = vmatpush.bf16.msra.mxu0 0
      %326 = vmatpush.bf16.msra.mxu0 0
      %327 = vmatpush.bf16.msra.mxu0 0
      %328 = vmatpush.bf16.msra.mxu0 0
      %329 = vmatpush.bf16.msra.mxu0 0
      %330 = vmatpush.bf16.msra.mxu0 0
      %331 = vmatpush.bf16.msra.mxu0 %v322
      %332 = vmatmul.bf16.gmra.mxu0 %v318
      %v333 = vpop.f32.mrf.mxu0
      %v334 = vadd.f32 0.0, %v333
      %v335 = vpop.f32.mrf.mxu0
      %336 = vdwg.mxu0
      %v338 = vsel %vm316, %v310, 0
      %v341 = vsel %vm320, %v311, 0
      %343 = vmatpush.bf16.msra.mxu0 0
      %344 = vmatpush.bf16.msra.mxu0 0
      %345 = vmatpush.bf16.msra.mxu0 0
      %346 = vmatpush.bf16.msra.mxu0 0
      %347 = vmatpush.bf16.msra.mxu0 0
      %348 = vmatpush.bf16.msra.mxu0 0
      %349 = vmatpush.bf16.msra.mxu0 0
      %350 = vmatpush.bf16.msra.mxu0 %v341
      %351 = vmatmul.bf16.gmra.mxu0 %v338
      %v352 = vpop.f32.mrf.mxu0
      %v353 = vadd.f32 %v334, %v352
      %v354 = vpop.f32.mrf.mxu0
      %355 = vdwg.mxu0
      %s356 = scalar_lea.vmem %s294, 8
      %v357 = vld [vmem:[%s356] sm:$0xf]
      %s358 = scalar_lea.vmem %s1, 8
      %v359 = vld [vmem:[%s358] sm:$0xf]
      %v361 = vsel %vm316, %v357, 0
      %v364 = vsel %vm320, %v359, 0
      %366 = vmatpush.bf16.msra.mxu0 0
      %367 = vmatpush.bf16.msra.mxu0 0
      %368 = vmatpush.bf16.msra.mxu0 0
      %369 = vmatpush.bf16.msra.mxu0 0
      %370 = vmatpush.bf16.msra.mxu0 0
      %371 = vmatpush.bf16.msra.mxu0 0
      %372 = vmatpush.bf16.msra.mxu0 0
      %373 = vmatpush.bf16.msra.mxu0 %v364
      %374 = vmatmul.bf16.gmra.mxu0 %v361
      %v375 = vpop.f32.mrf.mxu0
      %v376 = vadd.f32 0.0, %v375
      %v377 = vpop.f32.mrf.mxu0
      %378 = vdwg.mxu0
      %v379 = vadd.f32 %v353, %v376
      %s380 = scalar_lea.vmem %s294, 12
      %v381 = vld [vmem:[%s380] sm:$0xf]
      %s382 = scalar_lea.vmem %s1, 12
      %v383 = vld [vmem:[%s382] sm:$0xf]
      %v385 = vsel %vm316, %v381, 0
      %v388 = vsel %vm320, %v383, 0
      %390 = vmatpush.bf16.msra.mxu0 0
      %391 = vmatpush.bf16.msra.mxu0 0
      %392 = vmatpush.bf16.msra.mxu0 0
      %393 = vmatpush.bf16.msra.mxu0 0
      %394 = vmatpush.bf16.msra.mxu0 0
      %395 = vmatpush.bf16.msra.mxu0 0
      %396 = vmatpush.bf16.msra.mxu0 0
      %397 = vmatpush.bf16.msra.mxu0 %v388
      %398 = vmatmul.bf16.gmra.mxu0 %v385
      %v399 = vpop.f32.mrf.mxu0
      %v400 = vadd.f32 0.0, %v399
      %v401 = vpop.f32.mrf.mxu0
      %402 = vdwg.mxu0
      %v403 = vadd.f32 %v379, %v400
      %v404 = vld [vmem:[%s2] sm:$0x1]
      %v406 = vperm.slane %v404, 0
      %v408 = vadd.f32 %v403, %v406
      %v409 = vld [vmem:[%s301] sm:$0xff]
      %v410 = vadd.f32 %v408, %v409
      %v411 = vld [vmem:[%s4] sm:$0x1]
      %v412 = vld [vmem:[%s5] sm:$0x1]
      %vm413 = vcmask 261120
      %v414 = vsel %vm413, %v410, 0.0
      %415 = vadd.xlane.f32.xlu0 %v414
      %v416 = vpop.xlane.xlu0 %415
      %v417 = vrcp.pop 32.0
      %v418 = vmul.f32 32.0, %v417
      %v419 = vsub.f32 1.0, %v418
      %v420 = vmul.f32 %v417, %v419
      %v421 = vadd.f32 %v417, %v420
      %vm422 = vweird.f32 %v417
      %v423 = vsel %vm422, %v417, %v421
      %v424 = vmul.f32 %v416, %v423
      %v425 = vsub.f32 %v410, %v424
      %v426 = vmul.f32 %v425, %v425
      %v427 = vsel %vm413, %v426, 0.0
      %428 = vadd.xlane.f32.xlu0 %v427
      %v429 = vpop.xlane.xlu0 %428
      %v430 = vmul.f32 %v429, %v423
      %v431 = vadd.f32 %v430, 1e-05
      %v432 = vrsqrt.pop %v431
      %v433 = vmul.f32 %v432, %v431
      %v434 = vmul.f32 %v433, %v432
      %v435 = vmul.f32 0.5, %v434
      %v436 = vsub.f32 1.5, %v435
      %v437 = vmul.f32 %v432, %v436
      %vm438 = vweird.f32 %v431
      %vm439 = vweird.f32 %v432
      %vm440 = vmor %vm438, %vm439
      %v441 = vsel %vm440, %v432, %v437
      %v442 = vmul.f32 %v425, %v441
      %v444 = vperm.slane %v411, 0
      %v446 = vmul.f32 %v442, %v444
      %v448 = vperm.slane %v412, 0
      %v450 = vadd.f32 %v446, %v448
      %451 = vst.msk [vmem:[%s308] sm:$0xff] %vm413, %v450
      %p452 = scmp.lt.s32.totalorder %s21, 1
      %s453 = scalar_select %p452, %s21, 1
      %p454 = scmp.lt.s32.totalorder %s22, 0
      %s455 = scalar_select %p454, %s22, 0
      %s456 = sadd.s32 %s455, %s453
      %s457 = smul.addr %s456, 8
      %s458 = scalar_lea.vmem %s6, %s457
      // Predicated region
      $region45: #{transformer_model.12} parent=43 // pred_check
        %p459 = pneg %p189
      $region46: #{transformer_model.12} parent=43 // pred_check_branch
        %461 = sbr.rel (%p459) target = $region48
      $region47: #{transformer_model.12} parent=43 // pred_region
        _
      $region48: #{transformer_model.12} parent=43 // pred_fallthru
        _
    $region44: #{transformer_model.12} parent=5 // pred_fallthru
      _
    %p462 = scmp.le.s32.totalorder 2, %s12
    // Predicated region
    $region49: #{transformer_model.12} parent=5 // pred_check
      %p463 = pneg %p462
    $region50: #{transformer_model.12} parent=5 // pred_check_branch
      %465 = sbr.rel (%p463) target = $region52
    $region51: #{transformer_model.12} parent=5 // pred_region
      %s466 = ssub.s32 %s12, 2
      // Predicated region
      $region53: #{transformer_model.12} parent=51 // pred_check
        %p467 = pneg %p195
      $region54: #{transformer_model.12} parent=51 // pred_check_branch
        %469 = sbr.rel (%p467) target = $region56
      $region55: #{transformer_model.12} parent=51 // pred_region
        %p470 = scmp.lt.s32.totalorder %s23, 1
        %s471 = scalar_select %p470, %s23, 1
        %p472 = scmp.lt.s32.totalorder %s24, 0
        %s473 = scalar_select %p472, %s24, 0
        %s474 = sadd.s32 %s473, %s471
        %s475 = smul.addr %s474, 8
        %s476 = scalar_lea.vmem %s6, %s475
      $region56: #{transformer_model.12} parent=51 // pred_fallthru
        _
    $region52: #{transformer_model.12} parent=5 // pred_fallthru
      _
  $region6: #{transformer_model.12} parent=0 // loop_footer
    %s16 = sadd.s32 1, %s12
  $region7: #{transformer_model.12} parent=0 // loop_footer_branch
    %11 = sbr.rel target = $region3
  $region8: #{transformer_model.12} parent=0 // loop_exit
    _

// kernel: transformer_model.13
$region0: #{transformer_model.13}
  #allocation0 [shape = 'u32[]', space=smem, size = 0x4, offset = 0x4, fixed_abs, tag = 'smem constant byte address 0x4 - core index']
  #allocation1 [shape = 'u32[72,128]{1,0:T(1,128)}', space=vmem, size = 0x9000, scoped, tag = 'internal scratch']
  #allocation2 [shape = 'f32[16,32]{1,0:T(8,128)}', space=vmem, size = 0x2000, scoped, tag = 'scratch operand']
  %s0 = inlined_call_operand.vmem [shape: f32[16,32], index: 0, kind: input, shape index: {}]
  %s1 = inlined_call_operand.vmem [shape: bf16[32,64], index: 1, kind: input, shape index: {}]
  %s2 = inlined_call_operand.vmem [shape: f32[1,64], index: 2, kind: input, shape index: {}]
  %s3 = inlined_call_operand.vmem [shape: bf16[64,32], index: 3, kind: input, shape index: {}]
  %s4 = inlined_call_operand.vmem [shape: f32[1,32], index: 4, kind: input, shape index: {}]
  %s5 = inlined_call_operand.vmem [shape: f32[1,32], index: 5, kind: input, shape index: {}]
  %s6 = inlined_call_operand.vmem [shape: f32[1,32], index: 6, kind: input, shape index: {}]
  %s7 = inlined_call_operand.vmem [shape: f32[16,32], index: 7, kind: output, shape index: {}]
  %s8 = sld [smem:[#allocation0]]
  $region46: #{transformer_model.13} parent=0
    _
  %s10 = ssub.s32 1, %s8
  %s11 = scalar_select 0, %s10, %s8
  // Predicated region
  $region2: #{transformer_model.13} parent=0 // pred_check
    _
  $region3: #{transformer_model.13} parent=0 // pred_check_branch
    %13 = sbr.rel (0) target = $region5
  $region4: #{transformer_model.13} parent=0 // pred_region
    _
  $region5: #{transformer_model.13} parent=0 // pred_fallthru
    _
  // Predicated region
  $region6: #{transformer_model.13} parent=0 // pred_check
    _
  $region7: #{transformer_model.13} parent=0 // pred_check_branch
    %15 = sbr.rel (0) target = $region9
  $region8: #{transformer_model.13} parent=0 // pred_region
    _
  $region9: #{transformer_model.13} parent=0 // pred_fallthru
    _
  // Predicated region
  $region10: #{transformer_model.13} parent=0 // pred_check
    _
  $region11: #{transformer_model.13} parent=0 // pred_check_branch
    %17 = sbr.rel (0) target = $region13
  $region12: #{transformer_model.13} parent=0 // pred_region
    _
  $region13: #{transformer_model.13} parent=0 // pred_fallthru
    _
  // Predicated region
  $region14: #{transformer_model.13} parent=0 // pred_check
    _
  $region15: #{transformer_model.13} parent=0 // pred_check_branch
    %19 = sbr.rel (0) target = $region17
  $region16: #{transformer_model.13} parent=0 // pred_region
    _
  $region17: #{transformer_model.13} parent=0 // pred_fallthru
    _
  // Predicated region
  $region18: #{transformer_model.13} parent=0 // pred_check
    _
  $region19: #{transformer_model.13} parent=0 // pred_check_branch
    %21 = sbr.rel (0) target = $region21
  $region20: #{transformer_model.13} parent=0 // pred_region
    _
  $region21: #{transformer_model.13} parent=0 // pred_fallthru
    _
  // Predicated region
  $region22: #{transformer_model.13} parent=0 // pred_check
    _
  $region23: #{transformer_model.13} parent=0 // pred_check_branch
    %23 = sbr.rel (0) target = $region25
  $region24: #{transformer_model.13} parent=0 // pred_region
    _
  $region25: #{transformer_model.13} parent=0 // pred_fallthru
    _
  // Predicated region
  $region26: #{transformer_model.13} parent=0 // pred_check
    _
  $region27: #{transformer_model.13} parent=0 // pred_check_branch
    %25 = sbr.rel (0) target = $region29
  $region28: #{transformer_model.13} parent=0 // pred_region
    _
  $region29: #{transformer_model.13} parent=0 // pred_fallthru
    _
  %p27 = scmp.eq.s32.totalorder 0, 0
  // Predicated region
  $region30: #{transformer_model.13} parent=0 // pred_check
    %p28 = pneg %p27
  $region31: #{transformer_model.13} parent=0 // pred_check_branch
    %30 = sbr.rel (%p28) target = $region33
  $region32: #{transformer_model.13} parent=0 // pred_region
    %vm31 = vcmask 261120
    %32 = vst.msk [vmem:[#allocation2] sm:$0xff] %vm31, 0.0
    %33 = vst.msk [vmem:[#allocation2 + $0x8] sm:$0xff] %vm31, 0.0
  $region33: #{transformer_model.13} parent=0 // pred_fallthru
    _
  %v34 = vld [vmem:[%s0] sm:$0xff]
  %v35 = vld [vmem:[%s0 + $0x8] sm:$0xff]
  %v36 = vpack.c.bf16 %v35, %v34
  %v37 = vld [vmem:[%s1] sm:$0xf]
  %v38 = vld [vmem:[%s1 + $0x4] sm:$0xf]
  %v39 = vld [vmem:[%s1 + $0x8] sm:$0xf]
  %v40 = vld [vmem:[%s1 + $0xc] sm:$0xf]
  %v41 = vld [vmem:[%s2] sm:$0x1]
  %v43 = vperm.slane %v41, 0
  %v49 = vunpack.c.l.b16 %v37
  %v50 = vunpack.c.l.b16 %v38
  %v51 = vunpack.c.l.b16 %v39
  %v52 = vunpack.c.l.b16 %v40
  %v53 = vpack.c.b16 %v50, %v49
  %v54 = vpack.c.b16 %v52, %v51
  %vm57 = vcmask 261120
  %v59 = vsel %vm57, %v36, 0
  %61 = vmatpush.bf16.msra.mxu0 0
  %62 = vmatpush.bf16.msra.mxu0 0
  %63 = vmatpush.bf16.msra.mxu0 0
  %64 = vmatpush.bf16.msra.mxu0 0
  %65 = vmatpush.bf16.msra.mxu0 0
  %66 = vmatpush.bf16.msra.mxu0 0
  %67 = vmatpush.bf16.msra.mxu0 %v54
  %68 = vmatpush.bf16.msra.mxu0 %v53
  %69 = vmatmul.bf16.gmra.mxu0 %v59
  %v70 = vpop.f32.mrf.mxu0
  %v71 = vadd.f32 %v43, %v70
  %v72 = vpop.f32.mrf.mxu0
  %v73 = vadd.f32 %v43, %v72
  %74 = vdwg.mxu0
  %v75 = vmul.f32 %v71, 0.5
  %v76 = vmul.f32 %v73, 0.5
  %v77 = vmul.f32 %v71, 0.70710677
  %v78 = vmul.f32 %v73, 0.70710677
  %v79 = vmul.f32 %v77, %v77
  %v80 = vmin.f32 16.0, %v79
  %v81 = vmul.f32 %v80, 2.1237322e-06
  %v82 = vadd.f32 %v81, 0.00028619796
  %v83 = vmul.f32 %v80, %v82
  %v84 = vadd.f32 %v83, 0.0036580483
  %v85 = vmul.f32 %v80, %v84
  %v86 = vadd.f32 %v85, 0.05243302
  %v87 = vmul.f32 %v80, %v86
  %v88 = vadd.f32 %v87, 0.18741608
  %v89 = vmul.f32 %v80, %v88
  %v90 = vadd.f32 %v89, 1.1283791
  %v91 = vmul.f32 %v77, %v90
  %v92 = vmul.f32 %v80, 3.8918573e-05
  %v93 = vadd.f32 %v92, 0.001143296
  %v94 = vmul.f32 %v80, %v93
  %v95 = vadd.f32 %v94, 0.014752088
  %v96 = vmul.f32 %v80, %v95
  %v97 = vadd.f32 %v96, 0.112945676
  %v98 = vmul.f32 %v80, %v97
  %v99 = vadd.f32 %v98, 0.4994258
  %v100 = vmul.f32 %v80, %v99
  %v101 = vadd.f32 %v100, 1.0
  %v102 = vrcp.pop %v101
  %v103 = vmul.f32 %v101, %v102
  %v104 = vsub.f32 1.0, %v103
  %v105 = vmul.f32 %v102, %v104
  %v106 = vadd.f32 %v102, %v105
  %vm107 = vweird.f32 %v101
  %vm108 = vweird.f32 %v102
  %vm109 = vmor %vm107, %vm108
  %v110 = vsel %vm109, %v102, %v106
  %v111 = vand.u32 2147483647, %v101
  %vm112 = vcmp.eq.f32.partialorder %v111, 8.507059e+37
  %v113 = vand.u32 %v101, 2147483648
  %v114 = vor.u32 1.1754944e-38, %v113
  %v115 = vsel %vm112, %v114, %v110
  %v116 = vmul.f32 %v91, %v115
  %v117 = vmin.f32 %v116, 1.0
  %v118 = vmax.f32 %v117, -1.0
  %v119 = vmul.f32 %v78, %v78
  %v120 = vmin.f32 16.0, %v119
  %v121 = vmul.f32 %v120, 2.1237322e-06
  %v122 = vadd.f32 %v121, 0.00028619796
  %v123 = vmul.f32 %v120, %v122
  %v124 = vadd.f32 %v123, 0.0036580483
  %v125 = vmul.f32 %v120, %v124
  %v126 = vadd.f32 %v125, 0.05243302
  %v127 = vmul.f32 %v120, %v126
  %v128 = vadd.f32 %v127, 0.18741608
  %v129 = vmul.f32 %v120, %v128
  %v130 = vadd.f32 %v129, 1.1283791
  %v131 = vmul.f32 %v78, %v130
  %v132 = vmul.f32 %v120, 3.8918573e-05
  %v133 = vadd.f32 %v132, 0.001143296
  %v134 = vmul.f32 %v120, %v133
  %v135 = vadd.f32 %v134, 0.014752088
  %v136 = vmul.f32 %v120, %v135
  %v137 = vadd.f32 %v136, 0.112945676
  %v138 = vmul.f32 %v120, %v137
  %v139 = vadd.f32 %v138, 0.4994258
  %v140 = vmul.f32 %v120, %v139
  %v141 = vadd.f32 %v140, 1.0
  %v142 = vrcp.pop %v141
  %v143 = vmul.f32 %v141, %v142
  %v144 = vsub.f32 1.0, %v143
  %v145 = vmul.f32 %v142, %v144
  %v146 = vadd.f32 %v142, %v145
  %vm147 = vweird.f32 %v141
  %vm148 = vweird.f32 %v142
  %vm149 = vmor %vm147, %vm148
  %v150 = vsel %vm149, %v142, %v146
  %v151 = vand.u32 2147483647, %v141
  %vm152 = vcmp.eq.f32.partialorder %v151, 8.507059e+37
  %v153 = vand.u32 %v141, 2147483648
  %v154 = vor.u32 1.1754944e-38, %v153
  %v155 = vsel %vm152, %v154, %v150
  %v156 = vmul.f32 %v131, %v155
  %v157 = vmin.f32 %v156, 1.0
  %v158 = vmax.f32 %v157, -1.0
  %v159 = vadd.f32 %v118, 1.0
  %v160 = vadd.f32 %v158, 1.0
  %v161 = vmul.f32 %v75, %v159
  %v162 = vmul.f32 %v76, %v160
  %v163 = vld [vmem:[#allocation2] sm:$0xff]
  %v164 = vld [vmem:[#allocation2 + $0x8] sm:$0xff]
  %v165 = vpack.c.bf16 %v162, %v161
  %v166 = vld [vmem:[%s3] sm:$0xf]
  %v167 = vld [vmem:[%s3 + $0x4] sm:$0xf]
  %v168 = vld [vmem:[%s3 + $0x8] sm:$0xf]
  %v169 = vld [vmem:[%s3 + $0xc] sm:$0xf]
  %v170 = vld [vmem:[%s3 + $0x10] sm:$0xf]
  %v171 = vld [vmem:[%s3 + $0x14] sm:$0xf]
  %v172 = vld [vmem:[%s3 + $0x18] sm:$0xf]
  %v173 = vld [vmem:[%s3 + $0x1c] sm:$0xf]
  %v182 = vunpack.c.l.b16 %v166
  %v183 = vunpack.c.l.b16 %v167
  %v184 = vunpack.c.l.b16 %v168
  %v185 = vunpack.c.l.b16 %v169
  %v186 = vunpack.c.l.b16 %v170
  %v187 = vunpack.c.l.b16 %v171
  %v188 = vunpack.c.l.b16 %v172
  %v189 = vunpack.c.l.b16 %v173
  %v190 = vpack.c.b16 %v183, %v182
  %v191 = vpack.c.b16 %v185, %v184
  %v192 = vpack.c.b16 %v187, %v186
  %v193 = vpack.c.b16 %v189, %v188
  %vm198 = vcmask 523264
  %v200 = vsel %vm198, %v165, 0
  %202 = vmatpush.bf16.msra.mxu0 0
  %203 = vmatpush.bf16.msra.mxu0 0
  %204 = vmatpush.bf16.msra.mxu0 0
  %205 = vmatpush.bf16.msra.mxu0 0
  %206 = vmatpush.bf16.msra.mxu0 %v193
  %207 = vmatpush.bf16.msra.mxu0 %v192
  %208 = vmatpush.bf16.msra.mxu0 %v191
  %209 = vmatpush.bf16.msra.mxu0 %v190
  %210 = vmatmul.bf16.gmra.mxu0 %v200
  %v211 = vpop.f32.mrf.mxu0
  %v212 = vadd.f32 0.0, %v211
  %v213 = vpop.f32.mrf.mxu0
  %v214 = vadd.f32 0.0, %v213
  %215 = vdwg.mxu0
  %v216 = vadd.f32 %v163, %v212
  %v217 = vadd.f32 %v164, %v214
  %218 = vst.msk [vmem:[#allocation2] sm:$0xff] %vm57, %v216
  %219 = vst.msk [vmem:[#allocation2 + $0x8] sm:$0xff] %vm57, %v217
  // Predicated region
  $region34: #{transformer_model.13} parent=0 // pred_check
    %p220 = pneg %p27
  $region35: #{transformer_model.13} parent=0 // pred_check_branch
    %222 = sbr.rel (%p220) target = $region37
  $region36: #{transformer_model.13} parent=0 // pred_region
    %v223 = vld [vmem:[#allocation2] sm:$0xff]
    %v224 = vld [vmem:[#allocation2 + $0x8] sm:$0xff]
    %v225 = vld [vmem:[%s4] sm:$0x1]
    %v227 = vperm.slane %v225, 0
    %v229 = vadd.f32 %v223, %v227
    %v230 = vadd.f32 %v224, %v227
    %v231 = vadd.f32 %v229, %v34
    %v232 = vadd.f32 %v230, %v35
    %v233 = vld [vmem:[%s5] sm:$0x1]
    %v234 = vld [vmem:[%s6] sm:$0x1]
    %v235 = vsel %vm57, %v231, 0.0
    %236 = vadd.xlane.f32.xlu0 %v235
    %v237 = vpop.xlane.xlu0 %236
    %v238 = vsel %vm57, %v232, 0.0
    %239 = vadd.xlane.f32.xlu0 %v238
    %v240 = vpop.xlane.xlu0 %239
    %v241 = vrcp.pop 32.0
    %v242 = vmul.f32 32.0, %v241
    %v243 = vsub.f32 1.0, %v242
    %v244 = vmul.f32 %v241, %v243
    %v245 = vadd.f32 %v241, %v244
    %vm246 = vweird.f32 %v241
    %v247 = vsel %vm246, %v241, %v245
    %v248 = vmul.f32 %v237, %v247
    %v249 = vmul.f32 %v240, %v247
    %v250 = vsub.f32 %v231, %v248
    %v251 = vsub.f32 %v232, %v249
    %v252 = vmul.f32 %v250, %v250
    %v253 = vmul.f32 %v251, %v251
    %v254 = vsel %vm57, %v252, 0.0
    %255 = vadd.xlane.f32.xlu0 %v254
    %v256 = vpop.xlane.xlu0 %255
    %v257 = vsel %vm57, %v253, 0.0
    %258 = vadd.xlane.f32.xlu0 %v257
    %v259 = vpop.xlane.xlu0 %258
    %v260 = vmul.f32 %v256, %v247
    %v261 = vmul.f32 %v259, %v247
    %v262 = vadd.f32 %v260, 1e-05
    %v263 = vadd.f32 %v261, 1e-05
    %v264 = vrsqrt.pop %v262
    %v265 = vmul.f32 %v264, %v262
    %v266 = vmul.f32 %v265, %v264
    %v267 = vmul.f32 0.5, %v266
    %v268 = vsub.f32 1.5, %v267
    %v269 = vmul.f32 %v264, %v268
    %vm270 = vweird.f32 %v262
    %vm271 = vweird.f32 %v264
    %vm272 = vmor %vm270, %vm271
    %v273 = vsel %vm272, %v264, %v269
    %v274 = vrsqrt.pop %v263
    %v275 = vmul.f32 %v274, %v263
    %v276 = vmul.f32 %v275, %v274
    %v277 = vmul.f32 0.5, %v276
    %v278 = vsub.f32 1.5, %v277
    %v279 = vmul.f32 %v274, %v278
    %vm280 = vweird.f32 %v263
    %vm281 = vweird.f32 %v274
    %vm282 = vmor %vm280, %vm281
    %v283 = vsel %vm282, %v274, %v279
    %v284 = vmul.f32 %v250, %v273
    %v285 = vmul.f32 %v251, %v283
    %v287 = vperm.slane %v233, 0
    %v289 = vmul.f32 %v284, %v287
    %v290 = vmul.f32 %v285, %v287
    %v292 = vperm.slane %v234, 0
    %v294 = vadd.f32 %v289, %v292
    %v295 = vadd.f32 %v290, %v292
    %296 = vst.msk [vmem:[%s7] sm:$0xff] %vm57, %v294
    %297 = vst.msk [vmem:[%s7 + $0x8] sm:$0xff] %vm57, %v295
  $region37: #{transformer_model.13} parent=0 // pred_fallthru
    _
  // Predicated region
  $region38: #{transformer_model.13} parent=0 // pred_check
    _
  $region39: #{transformer_model.13} parent=0 // pred_check_branch
    %299 = sbr.rel (0) target = $region41
  $region40: #{transformer_model.13} parent=0 // pred_region
    _
  $region41: #{transformer_model.13} parent=0 // pred_fallthru
    _
  // Predicated region
  $region42: #{transformer_model.13} parent=0 // pred_check
    _
  $region43: #{transformer_model.13} parent=0 // pred_check_branch
    %301 = sbr.rel (0) target = $region45
  $region44: #{transformer_model.13} parent=0 // pred_region
    _
  $region45: #{transformer_model.13} parent=0 // pred_fallthru
    _

// kernel: transformer_model.18
$region0: #{transformer_model.18}
  #allocation0 [shape = 'u32[]', space=smem, size = 0x4, offset = 0x4, fixed_abs, tag = 'smem constant byte address 0x4 - core index']
  #allocation1 [shape = 'u32[72,128]{1,0:T(1,128)}', space=vmem, size = 0x9000, scoped, tag = 'internal scratch']
  #allocation2 [shape = 'f32[16,16]{1,0:T(8,128)}', space=vmem, size = 0x2000, scoped, tag = 'scratch operand']
  %s0 = inlined_call_operand.vmem [shape: f32[16,32], index: 0, kind: input, shape index: {}]
  %s1 = inlined_call_operand.vmem [shape: bf16[32,16], index: 1, kind: input, shape index: {}]
  %s2 = inlined_call_operand.vmem [shape: f32[1,16], index: 2, kind: input, shape index: {}]
  %s3 = inlined_call_operand.vmem [shape: f32[1,16], index: 3, kind: input, shape index: {}]
  %s4 = inlined_call_operand.vmem [shape: f32[1,16], index: 4, kind: input, shape index: {}]
  %s5 = inlined_call_operand.vmem [shape: f32[16,16], index: 5, kind: output, shape index: {}]
  %s6 = sld [smem:[#allocation0]]
  $region38: #{transformer_model.18} parent=0
    _
  %s8 = ssub.s32 1, %s6
  %s9 = scalar_select 0, %s8, %s6
  // Predicated region
  $region2: #{transformer_model.18} parent=0 // pred_check
    _
  $region3: #{transformer_model.18} parent=0 // pred_check_branch
    %11 = sbr.rel (0) target = $region5
  $region4: #{transformer_model.18} parent=0 // pred_region
    _
  $region5: #{transformer_model.18} parent=0 // pred_fallthru
    _
  // Predicated region
  $region6: #{transformer_model.18} parent=0 // pred_check
    _
  $region7: #{transformer_model.18} parent=0 // pred_check_branch
    %13 = sbr.rel (0) target = $region9
  $region8: #{transformer_model.18} parent=0 // pred_region
    _
  $region9: #{transformer_model.18} parent=0 // pred_fallthru
    _
  // Predicated region
  $region10: #{transformer_model.18} parent=0 // pred_check
    _
  $region11: #{transformer_model.18} parent=0 // pred_check_branch
    %15 = sbr.rel (0) target = $region13
  $region12: #{transformer_model.18} parent=0 // pred_region
    _
  $region13: #{transformer_model.18} parent=0 // pred_fallthru
    _
  // Predicated region
  $region14: #{transformer_model.18} parent=0 // pred_check
    _
  $region15: #{transformer_model.18} parent=0 // pred_check_branch
    %17 = sbr.rel (0) target = $region17
  $region16: #{transformer_model.18} parent=0 // pred_region
    _
  $region17: #{transformer_model.18} parent=0 // pred_fallthru
    _
  // Predicated region
  $region18: #{transformer_model.18} parent=0 // pred_check
    _
  $region19: #{transformer_model.18} parent=0 // pred_check_branch
    %19 = sbr.rel (0) target = $region21
  $region20: #{transformer_model.18} parent=0 // pred_region
    _
  $region21: #{transformer_model.18} parent=0 // pred_fallthru
    _
  %p21 = scmp.eq.s32.totalorder 0, 0
  // Predicated region
  $region22: #{transformer_model.18} parent=0 // pred_check
    %p22 = pneg %p21
  $region23: #{transformer_model.18} parent=0 // pred_check_branch
    %24 = sbr.rel (%p22) target = $region25
  $region24: #{transformer_model.18} parent=0 // pred_region
    %vm25 = vcmask 130048
    %26 = vst.msk [vmem:[#allocation2] sm:$0xff] %vm25, 0.0
    %27 = vst.msk [vmem:[#allocation2 + $0x8] sm:$0xff] %vm25, 0.0
  $region25: #{transformer_model.18} parent=0 // pred_fallthru
    _
  %v28 = vld [vmem:[#allocation2] sm:$0xff]
  %v29 = vld [vmem:[#allocation2 + $0x8] sm:$0xff]
  %v30 = vld [vmem:[%s0] sm:$0xff]
  %v31 = vld [vmem:[%s0 + $0x8] sm:$0xff]
  %v32 = vpack.c.bf16 %v31, %v30
  %v33 = vld [vmem:[%s1] sm:$0xf]
  %v34 = vld [vmem:[%s1 + $0x4] sm:$0xf]
  %v35 = vld [vmem:[%s1 + $0x8] sm:$0xf]
  %v36 = vld [vmem:[%s1 + $0xc] sm:$0xf]
  %v41 = vunpack.c.l.b16 %v33
  %v42 = vunpack.c.l.b16 %v34
  %v43 = vunpack.c.l.b16 %v35
  %v44 = vunpack.c.l.b16 %v36
  %v45 = vpack.c.b16 %v42, %v41
  %v46 = vpack.c.b16 %v44, %v43
  %vm49 = vcmask 261120
  %v51 = vsel %vm49, %v32, 0
  %53 = vmatpush.bf16.msra.mxu0 0
  %54 = vmatpush.bf16.msra.mxu0 0
  %55 = vmatpush.bf16.msra.mxu0 0
  %56 = vmatpush.bf16.msra.mxu0 0
  %57 = vmatpush.bf16.msra.mxu0 0
  %58 = vmatpush.bf16.msra.mxu0 0
  %59 = vmatpush.bf16.msra.mxu0 %v46
  %60 = vmatpush.bf16.msra.mxu0 %v45
  %61 = vmatmul.bf16.gmra.mxu0 %v51
  %v62 = vpop.f32.mrf.mxu0
  %v63 = vadd.f32 0.0, %v62
  %v64 = vpop.f32.mrf.mxu0
  %v65 = vadd.f32 0.0, %v64
  %66 = vdwg.mxu0
  %v67 = vadd.f32 %v28, %v63
  %v68 = vadd.f32 %v29, %v65
  %vm69 = vcmask 130048
  %70 = vst.msk [vmem:[#allocation2] sm:$0xff] %vm69, %v67
  %71 = vst.msk [vmem:[#allocation2 + $0x8] sm:$0xff] %vm69, %v68
  // Predicated region
  $region26: #{transformer_model.18} parent=0 // pred_check
    %p72 = pneg %p21
  $region27: #{transformer_model.18} parent=0 // pred_check_branch
    %74 = sbr.rel (%p72) target = $region29
  $region28: #{transformer_model.18} parent=0 // pred_region
    %v75 = vld [vmem:[#allocation2] sm:$0xff]
    %v76 = vld [vmem:[#allocation2 + $0x8] sm:$0xff]
    %v77 = vld [vmem:[%s2] sm:$0x1]
    %v79 = vperm.slane %v77, 0
    %v81 = vadd.f32 %v75, %v79
    %v82 = vadd.f32 %v76, %v79
    %v83 = vmul.f32 %v81, 0.5
    %v84 = vmul.f32 %v82, 0.5
    %v85 = vmul.f32 %v81, 0.70710677
    %v86 = vmul.f32 %v82, 0.70710677
    %v87 = vmul.f32 %v85, %v85
    %v88 = vmin.f32 16.0, %v87
    %v89 = vmul.f32 %v88, 2.1237322e-06
    %v90 = vadd.f32 %v89, 0.00028619796
    %v91 = vmul.f32 %v88, %v90
    %v92 = vadd.f32 %v91, 0.0036580483
    %v93 = vmul.f32 %v88, %v92
    %v94 = vadd.f32 %v93, 0.05243302
    %v95 = vmul.f32 %v88, %v94
    %v96 = vadd.f32 %v95, 0.18741608
    %v97 = vmul.f32 %v88, %v96
    %v98 = vadd.f32 %v97, 1.1283791
    %v99 = vmul.f32 %v85, %v98
    %v100 = vmul.f32 %v88, 3.8918573e-05
    %v101 = vadd.f32 %v100, 0.001143296
    %v102 = vmul.f32 %v88, %v101
    %v103 = vadd.f32 %v102, 0.014752088
    %v104 = vmul.f32 %v88, %v103
    %v105 = vadd.f32 %v104, 0.112945676
    %v106 = vmul.f32 %v88, %v105
    %v107 = vadd.f32 %v106, 0.4994258
    %v108 = vmul.f32 %v88, %v107
    %v109 = vadd.f32 %v108, 1.0
    %v110 = vrcp.pop %v109
    %v111 = vmul.f32 %v109, %v110
    %v112 = vsub.f32 1.0, %v111
    %v113 = vmul.f32 %v110, %v112
    %v114 = vadd.f32 %v110, %v113
    %vm115 = vweird.f32 %v109
    %vm116 = vweird.f32 %v110
    %vm117 = vmor %vm115, %vm116
    %v118 = vsel %vm117, %v110, %v114
    %v119 = vand.u32 2147483647, %v109
    %vm120 = vcmp.eq.f32.partialorder %v119, 8.507059e+37
    %v121 = vand.u32 %v109, 2147483648
    %v122 = vor.u32 1.1754944e-38, %v121
    %v123 = vsel %vm120, %v122, %v118
    %v124 = vmul.f32 %v99, %v123
    %v125 = vmin.f32 %v124, 1.0
    %v126 = vmax.f32 %v125, -1.0
    %v127 = vmul.f32 %v86, %v86
    %v128 = vmin.f32 16.0, %v127
    %v129 = vmul.f32 %v128, 2.1237322e-06
    %v130 = vadd.f32 %v129, 0.00028619796
    %v131 = vmul.f32 %v128, %v130
    %v132 = vadd.f32 %v131, 0.0036580483
    %v133 = vmul.f32 %v128, %v132
    %v134 = vadd.f32 %v133, 0.05243302
    %v135 = vmul.f32 %v128, %v134
    %v136 = vadd.f32 %v135, 0.18741608
    %v137 = vmul.f32 %v128, %v136
    %v138 = vadd.f32 %v137, 1.1283791
    %v139 = vmul.f32 %v86, %v138
    %v140 = vmul.f32 %v128, 3.8918573e-05
    %v141 = vadd.f32 %v140, 0.001143296
    %v142 = vmul.f32 %v128, %v141
    %v143 = vadd.f32 %v142, 0.014752088
    %v144 = vmul.f32 %v128, %v143
    %v145 = vadd.f32 %v144, 0.112945676
    %v146 = vmul.f32 %v128, %v145
    %v147 = vadd.f32 %v146, 0.4994258
    %v148 = vmul.f32 %v128, %v147
    %v149 = vadd.f32 %v148, 1.0
    %v150 = vrcp.pop %v149
    %v151 = vmul.f32 %v149, %v150
    %v152 = vsub.f32 1.0, %v151
    %v153 = vmul.f32 %v150, %v152
    %v154 = vadd.f32 %v150, %v153
    %vm155 = vweird.f32 %v149
    %vm156 = vweird.f32 %v150
    %vm157 = vmor %vm155, %vm156
    %v158 = vsel %vm157, %v150, %v154
    %v159 = vand.u32 2147483647, %v149
    %vm160 = vcmp.eq.f32.partialorder %v159, 8.507059e+37
    %v161 = vand.u32 %v149, 2147483648
    %v162 = vor.u32 1.1754944e-38, %v161
    %v163 = vsel %vm160, %v162, %v158
    %v164 = vmul.f32 %v139, %v163
    %v165 = vmin.f32 %v164, 1.0
    %v166 = vmax.f32 %v165, -1.0
    %v167 = vadd.f32 %v126, 1.0
    %v168 = vadd.f32 %v166, 1.0
    %v169 = vmul.f32 %v83, %v167
    %v170 = vmul.f32 %v84, %v168
    %v171 = vld [vmem:[%s3] sm:$0x1]
    %v172 = vld [vmem:[%s4] sm:$0x1]
    %v173 = vsel %vm69, %v169, 0.0
    %174 = vadd.xlane.f32.xlu0 %v173
    %v175 = vpop.xlane.xlu0 %174
    %v176 = vsel %vm69, %v170, 0.0
    %177 = vadd.xlane.f32.xlu0 %v176
    %v178 = vpop.xlane.xlu0 %177
    %v179 = vrcp.pop 16.0
    %v180 = vmul.f32 16.0, %v179
    %v181 = vsub.f32 1.0, %v180
    %v182 = vmul.f32 %v179, %v181
    %v183 = vadd.f32 %v179, %v182
    %vm184 = vweird.f32 %v179
    %v185 = vsel %vm184, %v179, %v183
    %v186 = vmul.f32 %v175, %v185
    %v187 = vmul.f32 %v178, %v185
    %v188 = vsub.f32 %v169, %v186
    %v189 = vsub.f32 %v170, %v187
    %v190 = vmul.f32 %v188, %v188
    %v191 = vmul.f32 %v189, %v189
    %v192 = vsel %vm69, %v190, 0.0
    %193 = vadd.xlane.f32.xlu0 %v192
    %v194 = vpop.xlane.xlu0 %193
    %v195 = vsel %vm69, %v191, 0.0
    %196 = vadd.xlane.f32.xlu0 %v195
    %v197 = vpop.xlane.xlu0 %196
    %v198 = vmul.f32 %v194, %v185
    %v199 = vmul.f32 %v197, %v185
    %v200 = vadd.f32 %v198, 1e-05
    %v201 = vadd.f32 %v199, 1e-05
    %v202 = vrsqrt.pop %v200
    %v203 = vmul.f32 %v202, %v200
    %v204 = vmul.f32 %v203, %v202
    %v205 = vmul.f32 0.5, %v204
    %v206 = vsub.f32 1.5, %v205
    %v207 = vmul.f32 %v202, %v206
    %vm208 = vweird.f32 %v200
    %vm209 = vweird.f32 %v202
    %vm210 = vmor %vm208, %vm209
    %v211 = vsel %vm210, %v202, %v207
    %v212 = vrsqrt.pop %v201
    %v213 = vmul.f32 %v212, %v201
    %v214 = vmul.f32 %v213, %v212
    %v215 = vmul.f32 0.5, %v214
    %v216 = vsub.f32 1.5, %v215
    %v217 = vmul.f32 %v212, %v216
    %vm218 = vweird.f32 %v201
    %vm219 = vweird.f32 %v212
    %vm220 = vmor %vm218, %vm219
    %v221 = vsel %vm220, %v212, %v217
    %v222 = vmul.f32 %v188, %v211
    %v223 = vmul.f32 %v189, %v221
    %v225 = vperm.slane %v171, 0
    %v227 = vmul.f32 %v222, %v225
    %v228 = vmul.f32 %v223, %v225
    %v230 = vperm.slane %v172, 0
    %v232 = vadd.f32 %v227, %v230
    %v233 = vadd.f32 %v228, %v230
    %234 = vst.msk [vmem:[%s5] sm:$0xff] %vm69, %v232
    %235 = vst.msk [vmem:[%s5 + $0x8] sm:$0xff] %vm69, %v233
  $region29: #{transformer_model.18} parent=0 // pred_fallthru
    _
  // Predicated region
  $region30: #{transformer_model.18} parent=0 // pred_check
    _
  $region31: #{transformer_model.18} parent=0 // pred_check_branch
    %237 = sbr.rel (0) target = $region33
  $region32: #{transformer_model.18} parent=0 // pred_region
    _
  $region33: #{transformer_model.18} parent=0 // pred_fallthru
    _
  // Predicated region
  $region34: #{transformer_model.18} parent=0 // pred_check
    _
  $region35: #{transformer_model.18} parent=0 // pred_check_branch
    %239 = sbr.rel (0) target = $region37
  $region36: #{transformer_model.18} parent=0 // pred_region
    _
  $region37: #{transformer_model.18} parent=0 // pred_fallthru
    _

// kernel: transformer_model.19
$region0: #{transformer_model.19}
  #allocation0 [shape = 'u32[]', space=smem, size = 0x4, offset = 0x4, fixed_abs, tag = 'smem constant byte address 0x4 - core index']
  #allocation1 [shape = 'u32[72,128]{1,0:T(1,128)}', space=vmem, size = 0x9000, scoped, tag = 'internal scratch']
  #allocation2 [shape = 'f32[16,128]{1,0:T(8,128)}', space=vmem, size = 0x2000, scoped, tag = 'scratch operand']
  %s0 = inlined_call_operand.vmem [shape: f32[16,16], index: 0, kind: input, shape index: {}]
  %s1 = inlined_call_operand.vmem [shape: bf16[16,128], index: 1, kind: input, shape index: {}]
  %s2 = inlined_call_operand.vmem [shape: f32[1,128], index: 2, kind: input, shape index: {}]
  %s3 = inlined_call_operand.vmem [shape: f32[16,128], index: 3, kind: output, shape index: {}]
  %s4 = sld [smem:[#allocation0]]
  $region30: #{transformer_model.19} parent=0
    _
  %s6 = ssub.s32 1, %s4
  %s7 = scalar_select 0, %s6, %s4
  // Predicated region
  $region2: #{transformer_model.19} parent=0 // pred_check
    _
  $region3: #{transformer_model.19} parent=0 // pred_check_branch
    %9 = sbr.rel (0) target = $region5
  $region4: #{transformer_model.19} parent=0 // pred_region
    _
  $region5: #{transformer_model.19} parent=0 // pred_fallthru
    _
  // Predicated region
  $region6: #{transformer_model.19} parent=0 // pred_check
    _
  $region7: #{transformer_model.19} parent=0 // pred_check_branch
    %11 = sbr.rel (0) target = $region9
  $region8: #{transformer_model.19} parent=0 // pred_region
    _
  $region9: #{transformer_model.19} parent=0 // pred_fallthru
    _
  // Predicated region
  $region10: #{transformer_model.19} parent=0 // pred_check
    _
  $region11: #{transformer_model.19} parent=0 // pred_check_branch
    %13 = sbr.rel (0) target = $region13
  $region12: #{transformer_model.19} parent=0 // pred_region
    _
  $region13: #{transformer_model.19} parent=0 // pred_fallthru
    _
  %p15 = scmp.eq.s32.totalorder 0, 0
  // Predicated region
  $region14: #{transformer_model.19} parent=0 // pred_check
    %p16 = pneg %p15
  $region15: #{transformer_model.19} parent=0 // pred_check_branch
    %18 = sbr.rel (%p16) target = $region17
  $region16: #{transformer_model.19} parent=0 // pred_region
    %19 = vst [vmem:[#allocation2] sm:$0xff] 0.0
    %20 = vst [vmem:[#allocation2 + $0x8] sm:$0xff] 0.0
  $region17: #{transformer_model.19} parent=0 // pred_fallthru
    _
  %v21 = vld [vmem:[%s0] sm:$0xff]
  %v22 = vld [vmem:[%s0 + $0x8] sm:$0xff]
  %v23 = vmin.f32 %v21, 20.0
  %v24 = vmin.f32 %v22, 20.0
  %vm25 = vcmp.gt.f32.partialorder %v21, 20.0
  %vm26 = vcmp.gt.f32.partialorder %v22, 20.0
  %v27 = vmul.f32 %v23, 1.442695
  %v28 = vpow.pop %v27
  %v29 = vmul.f32 %v24, 1.442695
  %v30 = vpow.pop %v29
  %v31 = vadd.f32 %v28, 1.0
  %v32 = vadd.f32 %v30, 1.0
  %v33 = vlog2.pop %v31
  %v34 = vmul.f32 %v33, 0.6931472
  %v35 = vlog2.pop %v32
  %v36 = vmul.f32 %v35, 0.6931472
  %v37 = vsel %vm25, %v21, %v34
  %v38 = vsel %vm26, %v22, %v36
  %v39 = vtanh.pop %v37
  %v40 = vtanh.pop %v38
  %v41 = vmul.f32 %v21, %v39
  %v42 = vmul.f32 %v22, %v40
  %v43 = vld [vmem:[#allocation2] sm:$0xff]
  %v44 = vld [vmem:[#allocation2 + $0x8] sm:$0xff]
  %v45 = vpack.c.bf16 %v42, %v41
  %v46 = vld [vmem:[%s1] sm:$0xf]
  %v47 = vld [vmem:[%s1 + $0x4] sm:$0xf]
  %v50 = vunpack.c.l.b16 %v46
  %v51 = vunpack.c.l.b16 %v47
  %v52 = vpack.c.b16 %v51, %v50
  %vm54 = vcmask 130048
  %v56 = vsel %vm54, %v45, 0
  %58 = vmatpush.bf16.msra.mxu0 0
  %59 = vmatpush.bf16.msra.mxu0 0
  %60 = vmatpush.bf16.msra.mxu0 0
  %61 = vmatpush.bf16.msra.mxu0 0
  %62 = vmatpush.bf16.msra.mxu0 0
  %63 = vmatpush.bf16.msra.mxu0 0
  %64 = vmatpush.bf16.msra.mxu0 0
  %65 = vmatpush.bf16.msra.mxu0 %v52
  %66 = vmatmul.bf16.gmra.mxu0 %v56
  %v67 = vpop.f32.mrf.mxu0
  %v68 = vadd.f32 0.0, %v67
  %v69 = vpop.f32.mrf.mxu0
  %v70 = vadd.f32 0.0, %v69
  %71 = vdwg.mxu0
  %v72 = vadd.f32 %v43, %v68
  %v73 = vadd.f32 %v44, %v70
  %74 = vst [vmem:[#allocation2] sm:$0xff] %v72
  %75 = vst [vmem:[#allocation2 + $0x8] sm:$0xff] %v73
  // Predicated region
  $region18: #{transformer_model.19} parent=0 // pred_check
    %p76 = pneg %p15
  $region19: #{transformer_model.19} parent=0 // pred_check_branch
    %78 = sbr.rel (%p76) target = $region21
  $region20: #{transformer_model.19} parent=0 // pred_region
    %v79 = vld [vmem:[#allocation2] sm:$0xff]
    %v80 = vld [vmem:[#allocation2 + $0x8] sm:$0xff]
    %v81 = vld [vmem:[%s2] sm:$0x1]
    %v83 = vperm.slane %v81, 0
    %v85 = vadd.f32 %v79, %v83
    %v86 = vadd.f32 %v80, %v83
    %87 = vst [vmem:[%s3] sm:$0xff] %v85
    %88 = vst [vmem:[%s3 + $0x8] sm:$0xff] %v86
  $region21: #{transformer_model.19} parent=0 // pred_fallthru
    _
  // Predicated region
  $region22: #{transformer_model.19} parent=0 // pred_check
    _
  $region23: #{transformer_model.19} parent=0 // pred_check_branch
    %90 = sbr.rel (0) target = $region25
  $region24: #{transformer_model.19} parent=0 // pred_region
    _
  $region25: #{transformer_model.19} parent=0 // pred_fallthru
    _
  // Predicated region
  $region26: #{transformer_model.19} parent=0 // pred_check
    _
  $region27: #{transformer_model.19} parent=0 // pred_check_branch
    %92 = sbr.rel (0) target = $region29
  $region28: #{transformer_model.19} parent=0 // pred_region
    _
  $region29: #{transformer_model.19} parent=0 // pred_fallthru
    _

</llo_original>
